<compile_context>
chip_gen: v6e
topology: v6e:2x2x1
jax: 0.10.0
libtpu: 0.0.40
codegen_flags: <defaults>
</compile_context>

<pallas_src>
import jax
import jax.numpy as jnp
from jax.experimental import pallas as pl
from jax.experimental.pallas import tpu as pltpu


LANE = 128  # TPU lane width: hidden dim is padded to this (once, at prep time)


def _round_up(x, m):
    return ((x + m - 1) // m) * m


# ---------------------------------------------------------------------------
# Kernel: one batch tile, all three layers + softmax fused in VMEM.
# ---------------------------------------------------------------------------
def policy_kernel(s_ref, w1_ref, b1_ref, w2_ref, b2_ref, w3_ref, b3_ref, o_ref):
    # bf16 operands into the MXU, f32 accumulation, f32 bias/ReLU/softmax.
    x = s_ref[...].astype(jnp.bfloat16)                               # (tb, s_dim)

    h1 = jnp.dot(x, w1_ref[...], preferred_element_type=jnp.float32) + b1_ref[...]
    h1 = jnp.maximum(h1, 0.0).astype(jnp.bfloat16)                    # (tb, H_pad)

    h2 = jnp.dot(h1, w2_ref[...], preferred_element_type=jnp.float32) + b2_ref[...]
    h2 = jnp.maximum(h2, 0.0).astype(jnp.bfloat16)                    # (tb, H_pad)

    logits = jnp.dot(h2, w3_ref[...], preferred_element_type=jnp.float32) + b3_ref[...]
    # logits: (tb, a_num) — no padded action columns, softmax over real actions.

    m = jnp.max(logits, axis=-1, keepdims=True)
    e = jnp.exp(logits - m)
    denom = jnp.sum(e, axis=-1, keepdims=True)
    o_ref[...] = (e / denom).astype(o_ref.dtype)   # exact divide (review item)


# ---------------------------------------------------------------------------
# One-time parameter prep: pad hidden dim to lane width, cast weights to bf16.
# ---------------------------------------------------------------------------
def prepare_params(params):
    w1, b1 = params["w1"], params["b1"]
    w2, b2 = params["w2"], params["b2"]
    w3, b3 = params["w3"], params["b3"]
    s_dim, hidden = w1.shape
    a_num = w3.shape[1]
    H_pad = _round_up(hidden, LANE)

    bf = jnp.bfloat16
    w1p = jnp.zeros((s_dim, H_pad), bf).at[:, :hidden].set(w1.astype(bf))
    b1p = jnp.zeros((1, H_pad), jnp.float32).at[:, :hidden].set(b1)
    w2p = jnp.zeros((H_pad, H_pad), bf).at[:hidden, :hidden].set(w2.astype(bf))
    b2p = jnp.zeros((1, H_pad), jnp.float32).at[:, :hidden].set(b2)
    w3p = jnp.zeros((H_pad, a_num), bf).at[:hidden, :].set(w3.astype(bf))
    b3p = b3.astype(jnp.float32).reshape(1, a_num)

    prepared = dict(w1=w1p, b1=b1p, w2=w2p, b2=b2p, w3=w3p, b3=b3p)
    dims = (s_dim, hidden, a_num, H_pad)
    return prepared, dims


# ---------------------------------------------------------------------------
# Forward: tile the batch; everything else lives in the kernel.
# ---------------------------------------------------------------------------
def policy_net_forward(s, prepared, dims, *, batch_tile=256):
    """s: (B, s_dim) float32. Returns softmax probabilities (B, a_num) float32."""
    s_dim, hidden, a_num, H_pad = dims
    B = s.shape[0]

    tb = min(batch_tile, B)
    assert B % tb == 0, "batch must be divisible by batch tile"
    assert tb == B or tb % 16 == 0, "batch tile must be a multiple of 16 (bf16 packing)"

    grid = (B // tb,)

    in_specs = [
        pl.BlockSpec((tb, s_dim), lambda i: (i, 0)),      # s tile (raw f32, unpadded)
        # Grid-constant weights / biases (fetched once).  Scaling note: mark
        # these pipeline_mode=pl.Buffered(1) when hidden grows and VMEM matters.
        pl.BlockSpec((s_dim, H_pad), lambda i: (0, 0)),   # w1
        pl.BlockSpec((1, H_pad), lambda i: (0, 0)),       # b1
        pl.BlockSpec((H_pad, H_pad), lambda i: (0, 0)),   # w2
        pl.BlockSpec((1, H_pad), lambda i: (0, 0)),       # b2
        pl.BlockSpec((H_pad, a_num), lambda i: (0, 0)),   # w3
        pl.BlockSpec((1, a_num), lambda i: (0, 0)),       # b3
    ]
    out_spec = pl.BlockSpec((tb, a_num), lambda i: (i, 0))  # exact (B, a_num) output

    return pl.pallas_call(
        policy_kernel,
        out_shape=jax.ShapeDtypeStruct((B, a_num), jnp.float32),
        grid=grid,
        in_specs=in_specs,
        out_specs=out_spec,
        compiler_params=pltpu.CompilerParams(
            # On v7x, swap to pltpu.CORE_PARALLEL (+ tb=128) to guarantee both
            # TensorCores get work; "parallel" is portable across generations.
            dimension_semantics=("parallel",),
        ),
    )(
        s,
        prepared["w1"], prepared["b1"],
        prepared["w2"], prepared["b2"],
        prepared["w3"], prepared["b3"],
    )


# ---------------------------------------------------------------------------
# Parameter init + references for verification.
# ---------------------------------------------------------------------------
def init_params(key, s_dim, hidden, a_num):
    k1, k2, k3, k4, k5, k6 = jax.random.split(key, 6)
    w1 = jax.random.normal(k1, (s_dim, hidden), jnp.float32) * 0.1
    b1 = jax.random.normal(k2, (1, hidden), jnp.float32) * 0.1
    w2 = jax.random.normal(k3, (hidden, hidden), jnp.float32) * 0.1
    b2 = jax.random.normal(k4, (1, hidden), jnp.float32) * 0.1
    w3 = jax.random.normal(k5, (hidden, a_num), jnp.float32) * 0.1
    b3 = jax.random.normal(k6, (1, a_num), jnp.float32) * 0.1
    return dict(w1=w1, b1=b1, w2=w2, b2=b2, w3=w3, b3=b3)


def reference_forward_f32(s, p):
    h1 = jnp.maximum(s @ p["w1"] + p["b1"], 0.0)
    h2 = jnp.maximum(h1 @ p["w2"] + p["b2"], 0.0)
    logits = h2 @ p["w3"] + p["b3"]
    return jax.nn.softmax(logits, axis=-1)


def reference_forward_mixed(s, p):
    """Same mixed precision as the kernel (bf16 matmul operands, f32 accum)."""
    bf = jnp.bfloat16
    h1 = jnp.maximum(
        jnp.dot(s.astype(bf), p["w1"].astype(bf), preferred_element_type=jnp.float32)
        + p["b1"], 0.0)
    h2 = jnp.maximum(
        jnp.dot(h1.astype(bf), p["w2"].astype(bf), preferred_element_type=jnp.float32)
        + p["b2"], 0.0)
    logits = (
        jnp.dot(h2.astype(bf), p["w3"].astype(bf), preferred_element_type=jnp.float32)
        + p["b3"])
    return jax.nn.softmax(logits, axis=-1)


if __name__ == "__main__":
    s_dim, hidden, a_num = 16, 32, 8
    batch = 512          # 2 grid steps of 256 rows

    key = jax.random.PRNGKey(0)
    k_s, k_p = jax.random.split(key)
    s = jax.random.normal(k_s, (batch, s_dim), jnp.float32)
    params = init_params(k_p, s_dim, hidden, a_num)

    prepared, dims = prepare_params(params)
    out = policy_net_forward(s, prepared, dims, batch_tile=256)
    out = jax.block_until_ready(out)

    assert out.shape == (batch, a_num)

    # Tight check against a reference with identical mixed precision.
    ref_mixed = reference_forward_mixed(s, params)
    assert jnp.allclose(out, ref_mixed, atol=5e-3, rtol=5e-3), \
        "mismatch vs mixed-precision reference"

    # Looser check against the pure-f32 PyTorch-equivalent forward (bf16-level error).
    ref_f32 = reference_forward_f32(s, params)
    assert jnp.allclose(out, ref_f32, atol=5e-2), "mismatch vs f32 reference"

    # Rows are exact probability distributions (exact divide in the kernel).
    assert jnp.allclose(jnp.sum(out, axis=-1), 1.0, atol=1e-4)

    print("KERNEL_OK")
</pallas_src>

<mosaic_0001>
module attributes {stable_mosaic.version = 11 : i64} {
  func.func @policy_kernel(%arg0: i32, %arg1: memref<256x16xf32, #tpu.memory_space<vmem>>, %arg2: memref<16x128xbf16, #tpu.memory_space<vmem>>, %arg3: memref<1x128xf32, #tpu.memory_space<vmem>>, %arg4: memref<128x128xbf16, #tpu.memory_space<vmem>>, %arg5: memref<1x128xf32, #tpu.memory_space<vmem>>, %arg6: memref<128x8xbf16, #tpu.memory_space<vmem>>, %arg7: memref<1x8xf32, #tpu.memory_space<vmem>>, %arg8: memref<256x8xf32, #tpu.memory_space<vmem>>) attributes {dimension_semantics = [#tpu.dimension_semantics<parallel>], iteration_bounds = array<i64: 2>, scalar_prefetch = 0 : i64, scratch_operands = 0 : i64, tpu.core_type = #tpu.core_type<tc>, window_params = [{transform_indices = @transform_0, window_bounds = array<i64: 256, 16>}, {pipeline_mode = #tpu.pipeline_mode<synchronous>, transform_indices = @transform_1, window_bounds = array<i64: 16, 128>}, {pipeline_mode = #tpu.pipeline_mode<synchronous>, transform_indices = @transform_2, window_bounds = array<i64: 1, 128>}, {pipeline_mode = #tpu.pipeline_mode<synchronous>, transform_indices = @transform_3, window_bounds = array<i64: 128, 128>}, {pipeline_mode = #tpu.pipeline_mode<synchronous>, transform_indices = @transform_4, window_bounds = array<i64: 1, 128>}, {pipeline_mode = #tpu.pipeline_mode<synchronous>, transform_indices = @transform_5, window_bounds = array<i64: 128, 8>}, {pipeline_mode = #tpu.pipeline_mode<synchronous>, transform_indices = @transform_6, window_bounds = array<i64: 1, 8>}, {transform_indices = @transform_7, window_bounds = array<i64: 256, 8>}]} {
    %c0 = arith.constant 0 : index
    %c0_0 = arith.constant 0 : index
    %0 = vector.load %arg1[%c0, %c0_0] : memref<256x16xf32, #tpu.memory_space<vmem>>, vector<256x16xf32>
    %1 = arith.truncf %0 : vector<256x16xf32> to vector<256x16xbf16>
    %c0_1 = arith.constant 0 : index
    %c0_2 = arith.constant 0 : index
    %2 = vector.load %arg2[%c0_1, %c0_2] : memref<16x128xbf16, #tpu.memory_space<vmem>>, vector<16x128xbf16>
    %cst = arith.constant dense<0.000000e+00> : vector<256x128xf32>
    %3 = tpu.matmul %1, %2, %cst {dimension_numbers = #tpu.dot_dimension_numbers<[1], [0], [0], [1], [0, 0, 1, 1], [], []>} : vector<256x16xbf16>, vector<16x128xbf16>, vector<256x128xf32> -> vector<256x128xf32>
    %c0_3 = arith.constant 0 : index
    %c0_4 = arith.constant 0 : index
    %4 = vector.load %arg3[%c0_3, %c0_4] : memref<1x128xf32, #tpu.memory_space<vmem>>, vector<1x128xf32>
    %5 = vector.broadcast %4 : vector<1x128xf32> to vector<256x128xf32>
    %6 = arith.addf %3, %5 : vector<256x128xf32>
    %cst_5 = arith.constant 0.000000e+00 : f32
    %7 = vector.broadcast %cst_5 : f32 to vector<256x128xf32>
    %8 = arith.maximumf %6, %7 : vector<256x128xf32>
    %9 = arith.truncf %8 : vector<256x128xf32> to vector<256x128xbf16>
    %c0_6 = arith.constant 0 : index
    %c0_7 = arith.constant 0 : index
    %10 = vector.load %arg4[%c0_6, %c0_7] : memref<128x128xbf16, #tpu.memory_space<vmem>>, vector<128x128xbf16>
    %cst_8 = arith.constant dense<0.000000e+00> : vector<256x128xf32>
    %11 = tpu.matmul %9, %10, %cst_8 {dimension_numbers = #tpu.dot_dimension_numbers<[1], [0], [0], [1], [0, 0, 1, 1], [], []>} : vector<256x128xbf16>, vector<128x128xbf16>, vector<256x128xf32> -> vector<256x128xf32>
    %c0_9 = arith.constant 0 : index
    %c0_10 = arith.constant 0 : index
    %12 = vector.load %arg5[%c0_9, %c0_10] : memref<1x128xf32, #tpu.memory_space<vmem>>, vector<1x128xf32>
    %13 = vector.broadcast %12 : vector<1x128xf32> to vector<256x128xf32>
    %14 = arith.addf %11, %13 : vector<256x128xf32>
    %cst_11 = arith.constant 0.000000e+00 : f32
    %15 = vector.broadcast %cst_11 : f32 to vector<256x128xf32>
    %16 = arith.maximumf %14, %15 : vector<256x128xf32>
    %17 = arith.truncf %16 : vector<256x128xf32> to vector<256x128xbf16>
    %c0_12 = arith.constant 0 : index
    %c0_13 = arith.constant 0 : index
    %18 = vector.load %arg6[%c0_12, %c0_13] : memref<128x8xbf16, #tpu.memory_space<vmem>>, vector<128x8xbf16>
    %cst_14 = arith.constant dense<0.000000e+00> : vector<256x8xf32>
    %19 = tpu.matmul %17, %18, %cst_14 {dimension_numbers = #tpu.dot_dimension_numbers<[1], [0], [0], [1], [0, 0, 1, 1], [], []>} : vector<256x128xbf16>, vector<128x8xbf16>, vector<256x8xf32> -> vector<256x8xf32>
    %c0_15 = arith.constant 0 : index
    %c0_16 = arith.constant 0 : index
    %20 = vector.load %arg7[%c0_15, %c0_16] : memref<1x8xf32, #tpu.memory_space<vmem>>, vector<1x8xf32>
    %21 = vector.broadcast %20 : vector<1x8xf32> to vector<256x8xf32>
    %22 = arith.addf %19, %21 : vector<256x8xf32>
    %cst_17 = arith.constant dense<0xFF800000> : vector<256xf32>
    %23 = vector.multi_reduction <maximumf>, %22, %cst_17 [1] : vector<256x8xf32> to vector<256xf32>
    %24 = vector.shape_cast %23 : vector<256xf32> to vector<256x1xf32>
    %25 = vector.broadcast %24 : vector<256x1xf32> to vector<256x8xf32>
    %26 = arith.subf %22, %25 : vector<256x8xf32>
    %27 = math.exp %26 : vector<256x8xf32>
    %cst_18 = arith.constant dense<0.000000e+00> : vector<256xf32>
    %28 = vector.multi_reduction <add>, %27, %cst_18 [1] : vector<256x8xf32> to vector<256xf32>
    %29 = vector.shape_cast %28 : vector<256xf32> to vector<256x1xf32>
    %30 = vector.broadcast %29 : vector<256x1xf32> to vector<256x8xf32>
    %31 = arith.divf %27, %30 : vector<256x8xf32>
    %c0_19 = arith.constant 0 : index
    %c0_20 = arith.constant 0 : index
    %32 = vector.load %arg8[%c0_19, %c0_20] : memref<256x8xf32, #tpu.memory_space<vmem>>, vector<256x8xf32>
    tpu.vector_store %arg8[%c0_19, %c0_20], %31 {strides = array<i32>} : memref<256x8xf32, #tpu.memory_space<vmem>>, vector<256x8xf32>,
    return
  }
  func.func @transform_0(%arg0: i32) -> (i32, i32) {
    %c0_i32 = arith.constant 0 : i32
    %c0_i32_0 = arith.constant 0 : i32
    return %arg0, %c0_i32 : i32, i32
  }
  func.func @transform_1(%arg0: i32) -> (i32, i32) {
    %c0_i32 = arith.constant 0 : i32
    %c0_i32_0 = arith.constant 0 : i32
    %c0_i32_1 = arith.constant 0 : i32
    return %c0_i32, %c0_i32_0 : i32, i32
  }
  func.func @transform_2(%arg0: i32) -> (i32, i32) {
    %c0_i32 = arith.constant 0 : i32
    %c0_i32_0 = arith.constant 0 : i32
    %c0_i32_1 = arith.constant 0 : i32
    return %c0_i32, %c0_i32_0 : i32, i32
  }
  func.func @transform_3(%arg0: i32) -> (i32, i32) {
    %c0_i32 = arith.constant 0 : i32
    %c0_i32_0 = arith.constant 0 : i32
    %c0_i32_1 = arith.constant 0 : i32
    return %c0_i32, %c0_i32_0 : i32, i32
  }
  func.func @transform_4(%arg0: i32) -> (i32, i32) {
    %c0_i32 = arith.constant 0 : i32
    %c0_i32_0 = arith.constant 0 : i32
    %c0_i32_1 = arith.constant 0 : i32
    return %c0_i32, %c0_i32_0 : i32, i32
  }
  func.func @transform_5(%arg0: i32) -> (i32, i32) {
    %c0_i32 = arith.constant 0 : i32
    %c0_i32_0 = arith.constant 0 : i32
    %c0_i32_1 = arith.constant 0 : i32
    return %c0_i32, %c0_i32_0 : i32, i32
  }
  func.func @transform_6(%arg0: i32) -> (i32, i32) {
    %c0_i32 = arith.constant 0 : i32
    %c0_i32_0 = arith.constant 0 : i32
    %c0_i32_1 = arith.constant 0 : i32
    return %c0_i32, %c0_i32_0 : i32, i32
  }
  func.func @transform_7(%arg0: i32) -> (i32, i32) {
    %c0_i32 = arith.constant 0 : i32
    %c0_i32_0 = arith.constant 0 : i32
    return %arg0, %c0_i32 : i32, i32
  }
}

</mosaic_0001>

<llo_original>
// kernel: tpu_custom_call.1
$region0: #{tpu_custom_call.1}
  #allocation0 [shape = 'u32[]', space=smem, size = 0x4, offset = 0x4, fixed_abs, tag = 'smem constant byte address 0x4 - core index']
  #allocation1 [shape = 'u32[144,128]{1,0:T(1,128)}', space=vmem, size = 0x12000, scoped, tag = 'internal scratch']
  %s0 = inlined_call_operand.vmem [shape: f32[512,16], index: 0, kind: input, shape index: {}]
  %s1 = inlined_call_operand.vmem [shape: bf16[16,128], index: 1, kind: input, shape index: {}]
  %s2 = inlined_call_operand.vmem [shape: f32[1,128], index: 2, kind: input, shape index: {}]
  %s3 = inlined_call_operand.vmem [shape: bf16[128,128], index: 3, kind: input, shape index: {}]
  %s4 = inlined_call_operand.vmem [shape: f32[1,128], index: 4, kind: input, shape index: {}]
  %s5 = inlined_call_operand.vmem [shape: bf16[128,8], index: 5, kind: input, shape index: {}]
  %s6 = inlined_call_operand.vmem [shape: f32[1,8], index: 6, kind: input, shape index: {}]
  %s7 = inlined_call_operand.vmem [shape: f32[512,8], index: 7, kind: output, shape index: {}]
  %s8 = sld [smem:[#allocation0]]
  $region61: #{tpu_custom_call.1} parent=0
    _
  %s10 = ssub.s32 1, %s8
  %s11 = scalar_select 0, %s10, %s8
  loop: start=0, step=1, limit=4
  $region2: #{tpu_custom_call.1} parent=0 // loop_pre_header
    _
  $region3: #{tpu_custom_call.1} parent=0 // loop_header
    %s13 = sphi 0, %s17
    %p14 = scmp.ge.s32.totalorder %s13, 4
    %s23 = sphi 0, %s25
    %s26 = sphi 0, %s23
    %s27 = sphi 0, %s26
    %s43 = sphi 0, %s27
    %s47 = sphi 0, %s47
    %s49 = sphi 0, %s47
    %s50 = sphi 0, %s49
    %s64 = sphi 0, %s50
    %s68 = sphi 0, %s68
    %s70 = sphi 0, %s68
    %s71 = sphi 0, %s70
    %s85 = sphi 0, %s71
    %s89 = sphi 0, %s89
    %s91 = sphi 0, %s89
    %s92 = sphi 0, %s91
    %s106 = sphi 0, %s92
    %s110 = sphi 0, %s110
    %s112 = sphi 0, %s110
    %s113 = sphi 0, %s112
    %s127 = sphi 0, %s113
    %s131 = sphi 0, %s131
    %s133 = sphi 0, %s131
    %s134 = sphi 0, %s133
    %s148 = sphi 0, %s134
    %s152 = sphi 0, %s152
    %s154 = sphi 0, %s152
    %s155 = sphi 0, %s154
    %s169 = sphi 0, %s155
    %s175 = sphi 0, %s177
    %s178 = sphi 0, %s175
    %s179 = sphi 0, %s178
    %s195 = sphi 0, %s179
  $region4: #{tpu_custom_call.1} parent=0 // loop_header_branch
    %16 = sbr.rel (%p14) target = $region8
  $region5: #{tpu_custom_call.1} parent=0 // loop_body
    %s18 = ssub.s32 %s13, 1
    %s19 = ssub.s32 %s13, 2
    %s20 = sadd.s32 %s13, 1
    %s21 = ssub.s32 %s13, %s20
    %p22 = scmp.eq.s32.totalorder %s21, 0
    %s24 = sadd.s32 %s23, 1
    %s25 = scalar_select %p22, %s23, %s24
    %p28 = pneg %p22
    %p29 = scmp.eq.s32.totalorder %s13, 1
    %p30 = por %p28, %p29
    %p31 = scmp.ne.s32.totalorder %s23, %s26
    %p32 = scmp.eq.s32.totalorder %s13, 0
    %p33 = por %p31, %p32
    %p34 = scmp.ne.s32.totalorder %s23, %s26
    %p35 = scmp.eq.s32.totalorder %s18, 1
    %p36 = por %p34, %p35
    %p37 = scmp.ne.s32.totalorder %s26, %s27
    %p38 = scmp.eq.s32.totalorder %s18, 0
    %p39 = por %p37, %p38
    %p40 = scmp.ne.s32.totalorder %s26, %s27
    %p41 = scmp.eq.s32.totalorder %s19, 1
    %p42 = por %p40, %p41
    %p44 = scmp.ne.s32.totalorder %s27, %s43
    %p45 = scmp.eq.s32.totalorder %s19, 0
    %p46 = por %p44, %p45
    %s48 = sadd.s32 %s47, 1
    %p51 = scmp.eq.s32.totalorder %s13, 1
    %p52 = scmp.ne.s32.totalorder %s47, %s49
    %p53 = scmp.eq.s32.totalorder %s13, 0
    %p54 = por %p52, %p53
    %p55 = scmp.ne.s32.totalorder %s47, %s49
    %p56 = scmp.eq.s32.totalorder %s18, 1
    %p57 = por %p55, %p56
    %p58 = scmp.ne.s32.totalorder %s49, %s50
    %p59 = scmp.eq.s32.totalorder %s18, 0
    %p60 = por %p58, %p59
    %p61 = scmp.ne.s32.totalorder %s49, %s50
    %p62 = scmp.eq.s32.totalorder %s19, 1
    %p63 = por %p61, %p62
    %p65 = scmp.ne.s32.totalorder %s50, %s64
    %p66 = scmp.eq.s32.totalorder %s19, 0
    %p67 = por %p65, %p66
    %s69 = sadd.s32 %s68, 1
    %p72 = scmp.eq.s32.totalorder %s13, 1
    %p73 = scmp.ne.s32.totalorder %s68, %s70
    %p74 = scmp.eq.s32.totalorder %s13, 0
    %p75 = por %p73, %p74
    %p76 = scmp.ne.s32.totalorder %s68, %s70
    %p77 = scmp.eq.s32.totalorder %s18, 1
    %p78 = por %p76, %p77
    %p79 = scmp.ne.s32.totalorder %s70, %s71
    %p80 = scmp.eq.s32.totalorder %s18, 0
    %p81 = por %p79, %p80
    %p82 = scmp.ne.s32.totalorder %s70, %s71
    %p83 = scmp.eq.s32.totalorder %s19, 1
    %p84 = por %p82, %p83
    %p86 = scmp.ne.s32.totalorder %s71, %s85
    %p87 = scmp.eq.s32.totalorder %s19, 0
    %p88 = por %p86, %p87
    %s90 = sadd.s32 %s89, 1
    %p93 = scmp.eq.s32.totalorder %s13, 1
    %p94 = scmp.ne.s32.totalorder %s89, %s91
    %p95 = scmp.eq.s32.totalorder %s13, 0
    %p96 = por %p94, %p95
    %p97 = scmp.ne.s32.totalorder %s89, %s91
    %p98 = scmp.eq.s32.totalorder %s18, 1
    %p99 = por %p97, %p98
    %p100 = scmp.ne.s32.totalorder %s91, %s92
    %p101 = scmp.eq.s32.totalorder %s18, 0
    %p102 = por %p100, %p101
    %p103 = scmp.ne.s32.totalorder %s91, %s92
    %p104 = scmp.eq.s32.totalorder %s19, 1
    %p105 = por %p103, %p104
    %p107 = scmp.ne.s32.totalorder %s92, %s106
    %p108 = scmp.eq.s32.totalorder %s19, 0
    %p109 = por %p107, %p108
    %s111 = sadd.s32 %s110, 1
    %p114 = scmp.eq.s32.totalorder %s13, 1
    %p115 = scmp.ne.s32.totalorder %s110, %s112
    %p116 = scmp.eq.s32.totalorder %s13, 0
    %p117 = por %p115, %p116
    %p118 = scmp.ne.s32.totalorder %s110, %s112
    %p119 = scmp.eq.s32.totalorder %s18, 1
    %p120 = por %p118, %p119
    %p121 = scmp.ne.s32.totalorder %s112, %s113
    %p122 = scmp.eq.s32.totalorder %s18, 0
    %p123 = por %p121, %p122
    %p124 = scmp.ne.s32.totalorder %s112, %s113
    %p125 = scmp.eq.s32.totalorder %s19, 1
    %p126 = por %p124, %p125
    %p128 = scmp.ne.s32.totalorder %s113, %s127
    %p129 = scmp.eq.s32.totalorder %s19, 0
    %p130 = por %p128, %p129
    %s132 = sadd.s32 %s131, 1
    %p135 = scmp.eq.s32.totalorder %s13, 1
    %p136 = scmp.ne.s32.totalorder %s131, %s133
    %p137 = scmp.eq.s32.totalorder %s13, 0
    %p138 = por %p136, %p137
    %p139 = scmp.ne.s32.totalorder %s131, %s133
    %p140 = scmp.eq.s32.totalorder %s18, 1
    %p141 = por %p139, %p140
    %p142 = scmp.ne.s32.totalorder %s133, %s134
    %p143 = scmp.eq.s32.totalorder %s18, 0
    %p144 = por %p142, %p143
    %p145 = scmp.ne.s32.totalorder %s133, %s134
    %p146 = scmp.eq.s32.totalorder %s19, 1
    %p147 = por %p145, %p146
    %p149 = scmp.ne.s32.totalorder %s134, %s148
    %p150 = scmp.eq.s32.totalorder %s19, 0
    %p151 = por %p149, %p150
    %s153 = sadd.s32 %s152, 1
    %p156 = scmp.eq.s32.totalorder %s13, 1
    %p157 = scmp.ne.s32.totalorder %s152, %s154
    %p158 = scmp.eq.s32.totalorder %s13, 0
    %p159 = por %p157, %p158
    %p160 = scmp.ne.s32.totalorder %s152, %s154
    %p161 = scmp.eq.s32.totalorder %s18, 1
    %p162 = por %p160, %p161
    %p163 = scmp.ne.s32.totalorder %s154, %s155
    %p164 = scmp.eq.s32.totalorder %s18, 0
    %p165 = por %p163, %p164
    %p166 = scmp.ne.s32.totalorder %s154, %s155
    %p167 = scmp.eq.s32.totalorder %s19, 1
    %p168 = por %p166, %p167
    %p170 = scmp.ne.s32.totalorder %s155, %s169
    %p171 = scmp.eq.s32.totalorder %s19, 0
    %p172 = por %p170, %p171
    %s173 = ssub.s32 %s13, %s20
    %p174 = scmp.eq.s32.totalorder %s173, 0
    %s176 = sadd.s32 %s175, 1
    %s177 = scalar_select %p174, %s175, %s176
    %p180 = pneg %p174
    %p181 = scmp.eq.s32.totalorder %s13, 1
    %p182 = por %p180, %p181
    %p183 = scmp.ne.s32.totalorder %s175, %s178
    %p184 = scmp.eq.s32.totalorder %s13, 0
    %p185 = por %p183, %p184
    %p186 = scmp.ne.s32.totalorder %s175, %s178
    %p187 = scmp.eq.s32.totalorder %s18, 1
    %p188 = por %p186, %p187
    %p189 = scmp.ne.s32.totalorder %s178, %s179
    %p190 = scmp.eq.s32.totalorder %s18, 0
    %p191 = por %p189, %p190
    %p192 = scmp.ne.s32.totalorder %s178, %s179
    %p193 = scmp.eq.s32.totalorder %s19, 1
    %p194 = por %p192, %p193
    %p196 = scmp.ne.s32.totalorder %s179, %s195
    %p197 = scmp.eq.s32.totalorder %s19, 0
    %p198 = por %p196, %p197
    %p199 = scmp.le.s32.totalorder 1, %s13
    %p200 = scmp.lt.s32.totalorder %s13, 3
    %p201 = pnand %p199, %p200
    %p202 = pneg %p201
    // Predicated region
    $region9: #{tpu_custom_call.1} parent=5 // pred_check
      _
    $region10: #{tpu_custom_call.1} parent=5 // pred_check_branch
      %204 = sbr.rel (%p201) target = $region12
    $region11: #{tpu_custom_call.1} parent=5 // pred_region
      %s205 = ssub.s32 %s13, 1
      // Predicated region
      $region13: #{tpu_custom_call.1} parent=11 // pred_check
        %p206 = pneg %p60
      $region14: #{tpu_custom_call.1} parent=11 // pred_check_branch
        %208 = sbr.rel (%p206) target = $region16
      $region15: #{tpu_custom_call.1} parent=11 // pred_region
        _
      $region16: #{tpu_custom_call.1} parent=11 // pred_fallthru
        _
      // Predicated region
      $region17: #{tpu_custom_call.1} parent=11 // pred_check
        %p209 = pneg %p81
      $region18: #{tpu_custom_call.1} parent=11 // pred_check_branch
        %211 = sbr.rel (%p209) target = $region20
      $region19: #{tpu_custom_call.1} parent=11 // pred_region
        _
      $region20: #{tpu_custom_call.1} parent=11 // pred_fallthru
        _
      // Predicated region
      $region21: #{tpu_custom_call.1} parent=11 // pred_check
        %p212 = pneg %p102
      $region22: #{tpu_custom_call.1} parent=11 // pred_check_branch
        %214 = sbr.rel (%p212) target = $region24
      $region23: #{tpu_custom_call.1} parent=11 // pred_region
        _
      $region24: #{tpu_custom_call.1} parent=11 // pred_fallthru
        _
      // Predicated region
      $region25: #{tpu_custom_call.1} parent=11 // pred_check
        %p215 = pneg %p123
      $region26: #{tpu_custom_call.1} parent=11 // pred_check_branch
        %217 = sbr.rel (%p215) target = $region28
      $region27: #{tpu_custom_call.1} parent=11 // pred_region
        _
      $region28: #{tpu_custom_call.1} parent=11 // pred_fallthru
        _
      // Predicated region
      $region29: #{tpu_custom_call.1} parent=11 // pred_check
        %p218 = pneg %p144
      $region30: #{tpu_custom_call.1} parent=11 // pred_check_branch
        %220 = sbr.rel (%p218) target = $region32
      $region31: #{tpu_custom_call.1} parent=11 // pred_region
        _
      $region32: #{tpu_custom_call.1} parent=11 // pred_fallthru
        _
      // Predicated region
      $region33: #{tpu_custom_call.1} parent=11 // pred_check
        %p221 = pneg %p165
      $region34: #{tpu_custom_call.1} parent=11 // pred_check_branch
        %223 = sbr.rel (%p221) target = $region36
      $region35: #{tpu_custom_call.1} parent=11 // pred_region
        _
      $region36: #{tpu_custom_call.1} parent=11 // pred_fallthru
        _
    $region12: #{tpu_custom_call.1} parent=5 // pred_fallthru
      _
    %p224 = scmp.lt.s32.totalorder %s13, 2
    // Predicated region
    $region37: #{tpu_custom_call.1} parent=5 // pred_check
      %p225 = pneg %p224
    $region38: #{tpu_custom_call.1} parent=5 // pred_check_branch
      %227 = sbr.rel (%p225) target = $region40
    $region39: #{tpu_custom_call.1} parent=5 // pred_region
      // Predicated region
      $region41: #{tpu_custom_call.1} parent=39 // pred_check
        %p228 = pneg %p33
      $region42: #{tpu_custom_call.1} parent=39 // pred_check_branch
        %230 = sbr.rel (%p228) target = $region44
      $region43: #{tpu_custom_call.1} parent=39 // pred_region
        %s231 = smul.u32 32, %s13
        %p232 = scmp.lt.s32.totalorder %s231, 63
        %s233 = scalar_select %p232, %s231, 63
        %s234 = smul.addr %s233, 8
        %s235 = scalar_lea.vmem %s0, %s234
        %s236 = smul.u32 32, %s13
      $region44: #{tpu_custom_call.1} parent=39 // pred_fallthru
        _
    $region40: #{tpu_custom_call.1} parent=5 // pred_fallthru
      _
    %p237 = scmp.le.s32.totalorder 1, %s13
    %p238 = scmp.lt.s32.totalorder %s13, 3
    %p239 = pnand %p237, %p238
    %p240 = pneg %p239
    // Predicated region
    $region45: #{tpu_custom_call.1} parent=5 // pred_check
      _
    $region46: #{tpu_custom_call.1} parent=5 // pred_check_branch
      %242 = sbr.rel (%p239) target = $region48
    $region47: #{tpu_custom_call.1} parent=5 // pred_region
      %s243 = ssub.s32 %s13, 1
      %s244 = smul.u32 32, %s18
      %p245 = scmp.lt.s32.totalorder %s244, 63
      %s246 = scalar_select %p245, %s244, 63
      %s247 = smul.addr %s246, 8
      %s248 = scalar_lea.vmem %s0, %s247
      %p249 = pneg %p39
      %p250 = pneg %p36
      %p251 = pneg %p60
      %p252 = pneg %p57
      %p253 = pneg %p81
      %p254 = pneg %p78
      %p255 = pneg %p102
      %p256 = pneg %p99
      %p257 = pneg %p123
      %p258 = pneg %p120
      %p259 = pneg %p144
      %p260 = pneg %p141
      %p261 = pneg %p165
      %p262 = pneg %p162
      %p263 = pneg %p191
      %p264 = pneg %p188
      %s265 = smul.u32 32, %s18
      %p266 = scmp.lt.s32.totalorder %s265, 63
      %s267 = scalar_select %p266, %s265, 63
      %s268 = smul.addr %s267, 8
      %s269 = scalar_lea.vmem %s7, %s268
      %s270 = smul.u32 32, %s18
      %p271 = scmp.lt.s32.totalorder %s270, 63
      %s272 = scalar_select %p271, %s270, 63
      %s273 = smul.addr %s272, 8
      %s274 = scalar_lea.vmem %s0, %s273
      %s275 = smul.u32 32, %s18
      %s276 = smul.u32 32, %s18
      %p277 = scmp.lt.s32.totalorder %s276, 63
      %s278 = scalar_select %p277, %s276, 63
      %s279 = smul.addr %s278, 8
      %s280 = scalar_lea.vmem %s7, %s279
      %s281 = smul.u32 32, %s18
      %v283 = vld [vmem:[%s274] sm:$0xff]
      %v284 = vld [vmem:[%s274 + $0x8] sm:$0xff]
      %v285 = vld [vmem:[%s274 + $0x10] sm:$0xff]
      %v286 = vld [vmem:[%s274 + $0x18] sm:$0xff]
      %v287 = vld [vmem:[%s274 + $0x20] sm:$0xff]
      %v288 = vld [vmem:[%s274 + $0x28] sm:$0xff]
      %v289 = vld [vmem:[%s274 + $0x30] sm:$0xff]
      %v290 = vld [vmem:[%s274 + $0x38] sm:$0xff]
      %v291 = vld [vmem:[%s274 + $0x40] sm:$0xff]
      %v292 = vld [vmem:[%s274 + $0x48] sm:$0xff]
      %v293 = vld [vmem:[%s274 + $0x50] sm:$0xff]
      %v294 = vld [vmem:[%s274 + $0x58] sm:$0xff]
      %v295 = vld [vmem:[%s274 + $0x60] sm:$0xff]
      %v296 = vld [vmem:[%s274 + $0x68] sm:$0xff]
      %v297 = vld [vmem:[%s274 + $0x70] sm:$0xff]
      %v298 = vld [vmem:[%s274 + $0x78] sm:$0xff]
      %v299 = vld [vmem:[%s274 + $0x80] sm:$0xff]
      %v300 = vld [vmem:[%s274 + $0x88] sm:$0xff]
      %v301 = vld [vmem:[%s274 + $0x90] sm:$0xff]
      %v302 = vld [vmem:[%s274 + $0x98] sm:$0xff]
      %v303 = vld [vmem:[%s274 + $0xa0] sm:$0xff]
      %v304 = vld [vmem:[%s274 + $0xa8] sm:$0xff]
      %v305 = vld [vmem:[%s274 + $0xb0] sm:$0xff]
      %v306 = vld [vmem:[%s274 + $0xb8] sm:$0xff]
      %v307 = vld [vmem:[%s274 + $0xc0] sm:$0xff]
      %v308 = vld [vmem:[%s274 + $0xc8] sm:$0xff]
      %v309 = vld [vmem:[%s274 + $0xd0] sm:$0xff]
      %v310 = vld [vmem:[%s274 + $0xd8] sm:$0xff]
      %v311 = vld [vmem:[%s274 + $0xe0] sm:$0xff]
      %v312 = vld [vmem:[%s274 + $0xe8] sm:$0xff]
      %v313 = vld [vmem:[%s274 + $0xf0] sm:$0xff]
      %v314 = vld [vmem:[%s274 + $0xf8] sm:$0xff]
      %v315 = vpack.c.bf16 %v284, %v283
      %v316 = vpack.c.bf16 %v286, %v285
      %v317 = vpack.c.bf16 %v288, %v287
      %v318 = vpack.c.bf16 %v290, %v289
      %v319 = vpack.c.bf16 %v292, %v291
      %v320 = vpack.c.bf16 %v294, %v293
      %v321 = vpack.c.bf16 %v296, %v295
      %v322 = vpack.c.bf16 %v298, %v297
      %v323 = vpack.c.bf16 %v300, %v299
      %v324 = vpack.c.bf16 %v302, %v301
      %v325 = vpack.c.bf16 %v304, %v303
      %v326 = vpack.c.bf16 %v306, %v305
      %v327 = vpack.c.bf16 %v308, %v307
      %v328 = vpack.c.bf16 %v310, %v309
      %v329 = vpack.c.bf16 %v312, %v311
      %v330 = vpack.c.bf16 %v314, %v313
      %v331 = vld [vmem:[%s1] sm:$0xf]
      %v332 = vld [vmem:[%s1 + $0x4] sm:$0xf]
      %v333 = vld [vmem:[%s2] sm:$0x1]
      %v335 = vlaneseq
      %v336 = vshrl.u32 %v335, 7
      %v337 = vsub.s32 0, %v336
      %v338 = vrot.slane %v333, %v337
      %v342 = vunpack.c.l.b16 %v331
      %v343 = vunpack.c.l.b16 %v332
      %v344 = vpack.c.b16 %v343, %v342
      %vm346 = vcmask 130048
      %v348 = vsel %vm346, %v315, 0
      %v351 = vsel %vm346, %v316, 0
      %v354 = vsel %vm346, %v317, 0
      %v357 = vsel %vm346, %v318, 0
      %v360 = vsel %vm346, %v319, 0
      %v363 = vsel %vm346, %v320, 0
      %v366 = vsel %vm346, %v321, 0
      %v369 = vsel %vm346, %v322, 0
      %v372 = vsel %vm346, %v323, 0
      %v375 = vsel %vm346, %v324, 0
      %v378 = vsel %vm346, %v325, 0
      %v381 = vsel %vm346, %v326, 0
      %v384 = vsel %vm346, %v327, 0
      %v387 = vsel %vm346, %v328, 0
      %v390 = vsel %vm346, %v329, 0
      %v393 = vsel %vm346, %v330, 0
      %395 = vmatprep.subr.bf16.mxu0 0
      %396 = vmatpush1.bf16.msra.mxu0 0
      %397 = vmatprep.subr.bf16.mxu0 0
      %398 = vmatpush1.bf16.msra.mxu0 0
      %399 = vmatprep.subr.bf16.mxu0 0
      %400 = vmatpush1.bf16.msra.mxu0 0
      %401 = vmatprep.subr.bf16.mxu0 0
      %402 = vmatpush1.bf16.msra.mxu0 0
      %403 = vmatprep.subr.bf16.mxu0 0
      %404 = vmatpush1.bf16.msra.mxu0 0
      %405 = vmatprep.subr.bf16.mxu0 0
      %406 = vmatpush1.bf16.msra.mxu0 0
      %407 = vmatprep.subr.bf16.mxu0 0
      %408 = vmatpush1.bf16.msra.mxu0 0
      %409 = vmatprep.subr.bf16.mxu0 0
      %410 = vmatpush1.bf16.msra.mxu0 %v344
      %411 = vmatprep.subr.bf16.mxu0 0
      %412 = vmatpush2.bf16.msra.mxu0 0
      %413 = vmatprep.subr.bf16.mxu0 0
      %414 = vmatpush2.bf16.msra.mxu0 0
      %415 = vmatprep.subr.bf16.mxu0 0
      %416 = vmatpush2.bf16.msra.mxu0 0
      %417 = vmatprep.subr.bf16.mxu0 0
      %418 = vmatpush2.bf16.msra.mxu0 0
      %419 = vmatprep.subr.bf16.mxu0 0
      %420 = vmatpush2.bf16.msra.mxu0 0
      %421 = vmatprep.subr.bf16.mxu0 0
      %422 = vmatpush2.bf16.msra.mxu0 0
      %423 = vmatprep.subr.bf16.mxu0 0
      %424 = vmatpush2.bf16.msra.mxu0 0
      %425 = vmatprep.subr.bf16.mxu0 0
      %426 = vmatpush2.bf16.msra.mxu0 0
      %427 = vmatprep.mubr.bf16.mxu0 0
      %428 = vmatmul.mubr.bf16.gmra.mxu0 %v348
      %v429 = vpop.f32.mrf.mxu0
      %v430 = vadd.f32 %v338, %v429
      %v431 = vpop.f32.mrf.mxu0
      %v432 = vpop.f32.mrf.mxu0
      %v433 = vadd.f32 %v338, %v432
      %v434 = vpop.f32.mrf.mxu0
      %435 = vmatprep.mubr.bf16.mxu0 0
      %436 = vmatmul.mubr.bf16.gmra.mxu0 %v351
      %v437 = vpop.f32.mrf.mxu0
      %v438 = vadd.f32 %v338, %v437
      %v439 = vpop.f32.mrf.mxu0
      %v440 = vpop.f32.mrf.mxu0
      %v441 = vadd.f32 %v338, %v440
      %v442 = vpop.f32.mrf.mxu0
      %443 = vmatprep.mubr.bf16.mxu0 0
      %444 = vmatmul.mubr.bf16.gmra.mxu0 %v354
      %v445 = vpop.f32.mrf.mxu0
      %v446 = vadd.f32 %v338, %v445
      %v447 = vpop.f32.mrf.mxu0
      %v448 = vpop.f32.mrf.mxu0
      %v449 = vadd.f32 %v338, %v448
      %v450 = vpop.f32.mrf.mxu0
      %451 = vmatprep.mubr.bf16.mxu0 0
      %452 = vmatmul.mubr.bf16.gmra.mxu0 %v357
      %v453 = vpop.f32.mrf.mxu0
      %v454 = vadd.f32 %v338, %v453
      %v455 = vpop.f32.mrf.mxu0
      %v456 = vpop.f32.mrf.mxu0
      %v457 = vadd.f32 %v338, %v456
      %v458 = vpop.f32.mrf.mxu0
      %459 = vmatprep.mubr.bf16.mxu0 0
      %460 = vmatmul.mubr.bf16.gmra.mxu0 %v360
      %v461 = vpop.f32.mrf.mxu0
      %v462 = vadd.f32 %v338, %v461
      %v463 = vpop.f32.mrf.mxu0
      %v464 = vpop.f32.mrf.mxu0
      %v465 = vadd.f32 %v338, %v464
      %v466 = vpop.f32.mrf.mxu0
      %467 = vmatprep.mubr.bf16.mxu0 0
      %468 = vmatmul.mubr.bf16.gmra.mxu0 %v363
      %v469 = vpop.f32.mrf.mxu0
      %v470 = vadd.f32 %v338, %v469
      %v471 = vpop.f32.mrf.mxu0
      %v472 = vpop.f32.mrf.mxu0
      %v473 = vadd.f32 %v338, %v472
      %v474 = vpop.f32.mrf.mxu0
      %475 = vmatprep.mubr.bf16.mxu0 0
      %476 = vmatmul.mubr.bf16.gmra.mxu0 %v366
      %v477 = vpop.f32.mrf.mxu0
      %v478 = vadd.f32 %v338, %v477
      %v479 = vpop.f32.mrf.mxu0
      %v480 = vpop.f32.mrf.mxu0
      %v481 = vadd.f32 %v338, %v480
      %v482 = vpop.f32.mrf.mxu0
      %483 = vmatprep.mubr.bf16.mxu0 0
      %484 = vmatmul.mubr.bf16.gmra.mxu0 %v369
      %v485 = vpop.f32.mrf.mxu0
      %v486 = vadd.f32 %v338, %v485
      %v487 = vpop.f32.mrf.mxu0
      %v488 = vpop.f32.mrf.mxu0
      %v489 = vadd.f32 %v338, %v488
      %v490 = vpop.f32.mrf.mxu0
      %491 = vmatprep.mubr.bf16.mxu0 0
      %492 = vmatmul.mubr.bf16.gmra.mxu0 %v372
      %v493 = vpop.f32.mrf.mxu0
      %v494 = vadd.f32 %v338, %v493
      %v495 = vpop.f32.mrf.mxu0
      %v496 = vpop.f32.mrf.mxu0
      %v497 = vadd.f32 %v338, %v496
      %v498 = vpop.f32.mrf.mxu0
      %499 = vmatprep.mubr.bf16.mxu0 0
      %500 = vmatmul.mubr.bf16.gmra.mxu0 %v375
      %v501 = vpop.f32.mrf.mxu0
      %v502 = vadd.f32 %v338, %v501
      %v503 = vpop.f32.mrf.mxu0
      %v504 = vpop.f32.mrf.mxu0
      %v505 = vadd.f32 %v338, %v504
      %v506 = vpop.f32.mrf.mxu0
      %507 = vmatprep.mubr.bf16.mxu0 0
      %508 = vmatmul.mubr.bf16.gmra.mxu0 %v378
      %v509 = vpop.f32.mrf.mxu0
      %v510 = vadd.f32 %v338, %v509
      %v511 = vpop.f32.mrf.mxu0
      %v512 = vpop.f32.mrf.mxu0
      %v513 = vadd.f32 %v338, %v512
      %v514 = vpop.f32.mrf.mxu0
      %515 = vmatprep.mubr.bf16.mxu0 0
      %516 = vmatmul.mubr.bf16.gmra.mxu0 %v381
      %v517 = vpop.f32.mrf.mxu0
      %v518 = vadd.f32 %v338, %v517
      %v519 = vpop.f32.mrf.mxu0
      %v520 = vpop.f32.mrf.mxu0
      %v521 = vadd.f32 %v338, %v520
      %v522 = vpop.f32.mrf.mxu0
      %523 = vmatprep.mubr.bf16.mxu0 0
      %524 = vmatmul.mubr.bf16.gmra.mxu0 %v384
      %v525 = vpop.f32.mrf.mxu0
      %v526 = vadd.f32 %v338, %v525
      %v527 = vpop.f32.mrf.mxu0
      %v528 = vpop.f32.mrf.mxu0
      %v529 = vadd.f32 %v338, %v528
      %v530 = vpop.f32.mrf.mxu0
      %531 = vmatprep.mubr.bf16.mxu0 0
      %532 = vmatmul.mubr.bf16.gmra.mxu0 %v387
      %v533 = vpop.f32.mrf.mxu0
      %v534 = vadd.f32 %v338, %v533
      %v535 = vpop.f32.mrf.mxu0
      %v536 = vpop.f32.mrf.mxu0
      %v537 = vadd.f32 %v338, %v536
      %v538 = vpop.f32.mrf.mxu0
      %539 = vmatprep.mubr.bf16.mxu0 0
      %540 = vmatmul.mubr.bf16.gmra.mxu0 %v390
      %v541 = vpop.f32.mrf.mxu0
      %v542 = vadd.f32 %v338, %v541
      %v543 = vpop.f32.mrf.mxu0
      %v544 = vpop.f32.mrf.mxu0
      %v545 = vadd.f32 %v338, %v544
      %v546 = vpop.f32.mrf.mxu0
      %547 = vmatprep.mubr.bf16.mxu0 0
      %548 = vmatmul.mubr.bf16.gmra.mxu0 %v393
      %v549 = vpop.f32.mrf.mxu0
      %v550 = vadd.f32 %v338, %v549
      %v551 = vpop.f32.mrf.mxu0
      %v552 = vpop.f32.mrf.mxu0
      %v553 = vadd.f32 %v338, %v552
      %v554 = vpop.f32.mrf.mxu0
      %555 = vdwg.mxu0
      %v556 = vmax.f32 %v430, 0.0
      %v557 = vmax.f32 %v433, 0.0
      %v558 = vmax.f32 %v438, 0.0
      %v559 = vmax.f32 %v441, 0.0
      %v560 = vmax.f32 %v446, 0.0
      %v561 = vmax.f32 %v449, 0.0
      %v562 = vmax.f32 %v454, 0.0
      %v563 = vmax.f32 %v457, 0.0
      %v564 = vmax.f32 %v462, 0.0
      %v565 = vmax.f32 %v465, 0.0
      %v566 = vmax.f32 %v470, 0.0
      %v567 = vmax.f32 %v473, 0.0
      %v568 = vmax.f32 %v478, 0.0
      %v569 = vmax.f32 %v481, 0.0
      %v570 = vmax.f32 %v486, 0.0
      %v571 = vmax.f32 %v489, 0.0
      %v572 = vmax.f32 %v494, 0.0
      %v573 = vmax.f32 %v497, 0.0
      %v574 = vmax.f32 %v502, 0.0
      %v575 = vmax.f32 %v505, 0.0
      %v576 = vmax.f32 %v510, 0.0
      %v577 = vmax.f32 %v513, 0.0
      %v578 = vmax.f32 %v518, 0.0
      %v579 = vmax.f32 %v521, 0.0
      %v580 = vmax.f32 %v526, 0.0
      %v581 = vmax.f32 %v529, 0.0
      %v582 = vmax.f32 %v534, 0.0
      %v583 = vmax.f32 %v537, 0.0
      %v584 = vmax.f32 %v542, 0.0
      %v585 = vmax.f32 %v545, 0.0
      %v586 = vmax.f32 %v550, 0.0
      %v587 = vmax.f32 %v553, 0.0
      %v588 = vpack.c.bf16 %v557, %v556
      %v589 = vpack.c.bf16 %v559, %v558
      %v590 = vpack.c.bf16 %v561, %v560
      %v591 = vpack.c.bf16 %v563, %v562
      %v592 = vpack.c.bf16 %v565, %v564
      %v593 = vpack.c.bf16 %v567, %v566
      %v594 = vpack.c.bf16 %v569, %v568
      %v595 = vpack.c.bf16 %v571, %v570
      %v596 = vpack.c.bf16 %v573, %v572
      %v597 = vpack.c.bf16 %v575, %v574
      %v598 = vpack.c.bf16 %v577, %v576
      %v599 = vpack.c.bf16 %v579, %v578
      %v600 = vpack.c.bf16 %v581, %v580
      %v601 = vpack.c.bf16 %v583, %v582
      %v602 = vpack.c.bf16 %v585, %v584
      %v603 = vpack.c.bf16 %v587, %v586
      %v604 = vld [vmem:[%s3] sm:$0xf]
      %v605 = vld [vmem:[%s3 + $0x4] sm:$0xf]
      %v606 = vld [vmem:[%s3 + $0x8] sm:$0xf]
      %v607 = vld [vmem:[%s3 + $0xc] sm:$0xf]
      %v608 = vld [vmem:[%s3 + $0x10] sm:$0xf]
      %v609 = vld [vmem:[%s3 + $0x14] sm:$0xf]
      %v610 = vld [vmem:[%s3 + $0x18] sm:$0xf]
      %v611 = vld [vmem:[%s3 + $0x1c] sm:$0xf]
      %v612 = vld [vmem:[%s3 + $0x20] sm:$0xf]
      %v613 = vld [vmem:[%s3 + $0x24] sm:$0xf]
      %v614 = vld [vmem:[%s3 + $0x28] sm:$0xf]
      %v615 = vld [vmem:[%s3 + $0x2c] sm:$0xf]
      %v616 = vld [vmem:[%s3 + $0x30] sm:$0xf]
      %v617 = vld [vmem:[%s3 + $0x34] sm:$0xf]
      %v618 = vld [vmem:[%s3 + $0x38] sm:$0xf]
      %v619 = vld [vmem:[%s3 + $0x3c] sm:$0xf]
      %v620 = vld [vmem:[%s4] sm:$0x1]
      %v622 = vlaneseq
      %v623 = vshrl.u32 %v622, 7
      %v624 = vsub.s32 0, %v623
      %v625 = vrot.slane %v620, %v624
      %v643 = vunpack.c.l.b16 %v604
      %v644 = vunpack.c.l.b16 %v605
      %v645 = vunpack.c.l.b16 %v606
      %v646 = vunpack.c.l.b16 %v607
      %v647 = vunpack.c.l.b16 %v608
      %v648 = vunpack.c.l.b16 %v609
      %v649 = vunpack.c.l.b16 %v610
      %v650 = vunpack.c.l.b16 %v611
      %v651 = vunpack.c.l.b16 %v612
      %v652 = vunpack.c.l.b16 %v613
      %v653 = vunpack.c.l.b16 %v614
      %v654 = vunpack.c.l.b16 %v615
      %v655 = vunpack.c.l.b16 %v616
      %v656 = vunpack.c.l.b16 %v617
      %v657 = vunpack.c.l.b16 %v618
      %v658 = vunpack.c.l.b16 %v619
      %v659 = vpack.c.b16 %v644, %v643
      %v660 = vpack.c.b16 %v646, %v645
      %v661 = vpack.c.b16 %v648, %v647
      %v662 = vpack.c.b16 %v650, %v649
      %v663 = vpack.c.b16 %v652, %v651
      %v664 = vpack.c.b16 %v654, %v653
      %v665 = vpack.c.b16 %v656, %v655
      %v666 = vpack.c.b16 %v658, %v657
      %675 = vmatprep.subr.bf16.mxu0 0
      %676 = vmatpush1.bf16.msra.mxu0 %v666
      %677 = vmatprep.subr.bf16.mxu0 0
      %678 = vmatpush1.bf16.msra.mxu0 %v665
      %679 = vmatprep.subr.bf16.mxu0 0
      %680 = vmatpush1.bf16.msra.mxu0 %v664
      %681 = vmatprep.subr.bf16.mxu0 0
      %682 = vmatpush1.bf16.msra.mxu0 %v663
      %683 = vmatprep.subr.bf16.mxu0 0
      %684 = vmatpush1.bf16.msra.mxu0 %v662
      %685 = vmatprep.subr.bf16.mxu0 0
      %686 = vmatpush1.bf16.msra.mxu0 %v661
      %687 = vmatprep.subr.bf16.mxu0 0
      %688 = vmatpush1.bf16.msra.mxu0 %v660
      %689 = vmatprep.subr.bf16.mxu0 0
      %690 = vmatpush1.bf16.msra.mxu0 %v659
      %691 = vmatprep.subr.bf16.mxu0 0
      %692 = vmatpush2.bf16.msra.mxu0 0
      %693 = vmatprep.subr.bf16.mxu0 0
      %694 = vmatpush2.bf16.msra.mxu0 0
      %695 = vmatprep.subr.bf16.mxu0 0
      %696 = vmatpush2.bf16.msra.mxu0 0
      %697 = vmatprep.subr.bf16.mxu0 0
      %698 = vmatpush2.bf16.msra.mxu0 0
      %699 = vmatprep.subr.bf16.mxu0 0
      %700 = vmatpush2.bf16.msra.mxu0 0
      %701 = vmatprep.subr.bf16.mxu0 0
      %702 = vmatpush2.bf16.msra.mxu0 0
      %703 = vmatprep.subr.bf16.mxu0 0
      %704 = vmatpush2.bf16.msra.mxu0 0
      %705 = vmatprep.subr.bf16.mxu0 0
      %706 = vmatpush2.bf16.msra.mxu0 0
      %707 = vmatprep.mubr.bf16.mxu0 0
      %708 = vmatmul.mubr.bf16.gmra.mxu0 %v588
      %v709 = vpop.f32.mrf.mxu0
      %v710 = vadd.f32 %v625, %v709
      %v711 = vpop.f32.mrf.mxu0
      %v712 = vpop.f32.mrf.mxu0
      %v713 = vadd.f32 %v625, %v712
      %v714 = vpop.f32.mrf.mxu0
      %715 = vmatprep.mubr.bf16.mxu0 0
      %716 = vmatmul.mubr.bf16.gmra.mxu0 %v589
      %v717 = vpop.f32.mrf.mxu0
      %v718 = vadd.f32 %v625, %v717
      %v719 = vpop.f32.mrf.mxu0
      %v720 = vpop.f32.mrf.mxu0
      %v721 = vadd.f32 %v625, %v720
      %v722 = vpop.f32.mrf.mxu0
      %723 = vmatprep.mubr.bf16.mxu0 0
      %724 = vmatmul.mubr.bf16.gmra.mxu0 %v590
      %v725 = vpop.f32.mrf.mxu0
      %v726 = vadd.f32 %v625, %v725
      %v727 = vpop.f32.mrf.mxu0
      %v728 = vpop.f32.mrf.mxu0
      %v729 = vadd.f32 %v625, %v728
      %v730 = vpop.f32.mrf.mxu0
      %731 = vmatprep.mubr.bf16.mxu0 0
      %732 = vmatmul.mubr.bf16.gmra.mxu0 %v591
      %v733 = vpop.f32.mrf.mxu0
      %v734 = vadd.f32 %v625, %v733
      %v735 = vpop.f32.mrf.mxu0
      %v736 = vpop.f32.mrf.mxu0
      %v737 = vadd.f32 %v625, %v736
      %v738 = vpop.f32.mrf.mxu0
      %739 = vmatprep.mubr.bf16.mxu0 0
      %740 = vmatmul.mubr.bf16.gmra.mxu0 %v592
      %v741 = vpop.f32.mrf.mxu0
      %v742 = vadd.f32 %v625, %v741
      %v743 = vpop.f32.mrf.mxu0
      %v744 = vpop.f32.mrf.mxu0
      %v745 = vadd.f32 %v625, %v744
      %v746 = vpop.f32.mrf.mxu0
      %747 = vmatprep.mubr.bf16.mxu0 0
      %748 = vmatmul.mubr.bf16.gmra.mxu0 %v593
      %v749 = vpop.f32.mrf.mxu0
      %v750 = vadd.f32 %v625, %v749
      %v751 = vpop.f32.mrf.mxu0
      %v752 = vpop.f32.mrf.mxu0
      %v753 = vadd.f32 %v625, %v752
      %v754 = vpop.f32.mrf.mxu0
      %755 = vmatprep.mubr.bf16.mxu0 0
      %756 = vmatmul.mubr.bf16.gmra.mxu0 %v594
      %v757 = vpop.f32.mrf.mxu0
      %v758 = vadd.f32 %v625, %v757
      %v759 = vpop.f32.mrf.mxu0
      %v760 = vpop.f32.mrf.mxu0
      %v761 = vadd.f32 %v625, %v760
      %v762 = vpop.f32.mrf.mxu0
      %763 = vmatprep.mubr.bf16.mxu0 0
      %764 = vmatmul.mubr.bf16.gmra.mxu0 %v595
      %v765 = vpop.f32.mrf.mxu0
      %v766 = vadd.f32 %v625, %v765
      %v767 = vpop.f32.mrf.mxu0
      %v768 = vpop.f32.mrf.mxu0
      %v769 = vadd.f32 %v625, %v768
      %v770 = vpop.f32.mrf.mxu0
      %771 = vmatprep.mubr.bf16.mxu0 0
      %772 = vmatmul.mubr.bf16.gmra.mxu0 %v596
      %v773 = vpop.f32.mrf.mxu0
      %v774 = vadd.f32 %v625, %v773
      %v775 = vpop.f32.mrf.mxu0
      %v776 = vpop.f32.mrf.mxu0
      %v777 = vadd.f32 %v625, %v776
      %v778 = vpop.f32.mrf.mxu0
      %779 = vmatprep.mubr.bf16.mxu0 0
      %780 = vmatmul.mubr.bf16.gmra.mxu0 %v597
      %v781 = vpop.f32.mrf.mxu0
      %v782 = vadd.f32 %v625, %v781
      %v783 = vpop.f32.mrf.mxu0
      %v784 = vpop.f32.mrf.mxu0
      %v785 = vadd.f32 %v625, %v784
      %v786 = vpop.f32.mrf.mxu0
      %787 = vmatprep.mubr.bf16.mxu0 0
      %788 = vmatmul.mubr.bf16.gmra.mxu0 %v598
      %v789 = vpop.f32.mrf.mxu0
      %v790 = vadd.f32 %v625, %v789
      %v791 = vpop.f32.mrf.mxu0
      %v792 = vpop.f32.mrf.mxu0
      %v793 = vadd.f32 %v625, %v792
      %v794 = vpop.f32.mrf.mxu0
      %795 = vmatprep.mubr.bf16.mxu0 0
      %796 = vmatmul.mubr.bf16.gmra.mxu0 %v599
      %v797 = vpop.f32.mrf.mxu0
      %v798 = vadd.f32 %v625, %v797
      %v799 = vpop.f32.mrf.mxu0
      %v800 = vpop.f32.mrf.mxu0
      %v801 = vadd.f32 %v625, %v800
      %v802 = vpop.f32.mrf.mxu0
      %803 = vmatprep.mubr.bf16.mxu0 0
      %804 = vmatmul.mubr.bf16.gmra.mxu0 %v600
      %v805 = vpop.f32.mrf.mxu0
      %v806 = vadd.f32 %v625, %v805
      %v807 = vpop.f32.mrf.mxu0
      %v808 = vpop.f32.mrf.mxu0
      %v809 = vadd.f32 %v625, %v808
      %v810 = vpop.f32.mrf.mxu0
      %811 = vmatprep.mubr.bf16.mxu0 0
      %812 = vmatmul.mubr.bf16.gmra.mxu0 %v601
      %v813 = vpop.f32.mrf.mxu0
      %v814 = vadd.f32 %v625, %v813
      %v815 = vpop.f32.mrf.mxu0
      %v816 = vpop.f32.mrf.mxu0
      %v817 = vadd.f32 %v625, %v816
      %v818 = vpop.f32.mrf.mxu0
      %819 = vmatprep.mubr.bf16.mxu0 0
      %820 = vmatmul.mubr.bf16.gmra.mxu0 %v602
      %v821 = vpop.f32.mrf.mxu0
      %v822 = vadd.f32 %v625, %v821
      %v823 = vpop.f32.mrf.mxu0
      %v824 = vpop.f32.mrf.mxu0
      %v825 = vadd.f32 %v625, %v824
      %v826 = vpop.f32.mrf.mxu0
      %827 = vmatprep.mubr.bf16.mxu0 0
      %828 = vmatmul.mubr.bf16.gmra.mxu0 %v603
      %v829 = vpop.f32.mrf.mxu0
      %v830 = vadd.f32 %v625, %v829
      %v831 = vpop.f32.mrf.mxu0
      %v832 = vpop.f32.mrf.mxu0
      %v833 = vadd.f32 %v625, %v832
      %v834 = vpop.f32.mrf.mxu0
      %835 = vdwg.mxu0
      %v836 = vmax.f32 %v710, 0.0
      %v837 = vmax.f32 %v713, 0.0
      %v838 = vmax.f32 %v718, 0.0
      %v839 = vmax.f32 %v721, 0.0
      %v840 = vmax.f32 %v726, 0.0
      %v841 = vmax.f32 %v729, 0.0
      %v842 = vmax.f32 %v734, 0.0
      %v843 = vmax.f32 %v737, 0.0
      %v844 = vmax.f32 %v742, 0.0
      %v845 = vmax.f32 %v745, 0.0
      %v846 = vmax.f32 %v750, 0.0
      %v847 = vmax.f32 %v753, 0.0
      %v848 = vmax.f32 %v758, 0.0
      %v849 = vmax.f32 %v761, 0.0
      %v850 = vmax.f32 %v766, 0.0
      %v851 = vmax.f32 %v769, 0.0
      %v852 = vmax.f32 %v774, 0.0
      %v853 = vmax.f32 %v777, 0.0
      %v854 = vmax.f32 %v782, 0.0
      %v855 = vmax.f32 %v785, 0.0
      %v856 = vmax.f32 %v790, 0.0
      %v857 = vmax.f32 %v793, 0.0
      %v858 = vmax.f32 %v798, 0.0
      %v859 = vmax.f32 %v801, 0.0
      %v860 = vmax.f32 %v806, 0.0
      %v861 = vmax.f32 %v809, 0.0
      %v862 = vmax.f32 %v814, 0.0
      %v863 = vmax.f32 %v817, 0.0
      %v864 = vmax.f32 %v822, 0.0
      %v865 = vmax.f32 %v825, 0.0
      %v866 = vmax.f32 %v830, 0.0
      %v867 = vmax.f32 %v833, 0.0
      %v868 = vpack.c.bf16 %v837, %v836
      %v869 = vpack.c.bf16 %v839, %v838
      %v870 = vpack.c.bf16 %v841, %v840
      %v871 = vpack.c.bf16 %v843, %v842
      %v872 = vpack.c.bf16 %v845, %v844
      %v873 = vpack.c.bf16 %v847, %v846
      %v874 = vpack.c.bf16 %v849, %v848
      %v875 = vpack.c.bf16 %v851, %v850
      %v876 = vpack.c.bf16 %v853, %v852
      %v877 = vpack.c.bf16 %v855, %v854
      %v878 = vpack.c.bf16 %v857, %v856
      %v879 = vpack.c.bf16 %v859, %v858
      %v880 = vpack.c.bf16 %v861, %v860
      %v881 = vpack.c.bf16 %v863, %v862
      %v882 = vpack.c.bf16 %v865, %v864
      %v883 = vpack.c.bf16 %v867, %v866
      %v884 = vld [vmem:[%s5] sm:$0xf]
      %v885 = vld [vmem:[%s5 + $0x4] sm:$0xf]
      %v886 = vld [vmem:[%s5 + $0x8] sm:$0xf]
      %v887 = vld [vmem:[%s5 + $0xc] sm:$0xf]
      %v888 = vld [vmem:[%s5 + $0x10] sm:$0xf]
      %v889 = vld [vmem:[%s5 + $0x14] sm:$0xf]
      %v890 = vld [vmem:[%s5 + $0x18] sm:$0xf]
      %v891 = vld [vmem:[%s5 + $0x1c] sm:$0xf]
      %v892 = vld [vmem:[%s5 + $0x20] sm:$0xf]
      %v893 = vld [vmem:[%s5 + $0x24] sm:$0xf]
      %v894 = vld [vmem:[%s5 + $0x28] sm:$0xf]
      %v895 = vld [vmem:[%s5 + $0x2c] sm:$0xf]
      %v896 = vld [vmem:[%s5 + $0x30] sm:$0xf]
      %v897 = vld [vmem:[%s5 + $0x34] sm:$0xf]
      %v898 = vld [vmem:[%s5 + $0x38] sm:$0xf]
      %v899 = vld [vmem:[%s5 + $0x3c] sm:$0xf]
      %v900 = vld [vmem:[%s6] sm:$0x1]
      %v902 = vlaneseq
      %v903 = vshrl.u32 %v902, 7
      %v904 = vsub.s32 0, %v903
      %v905 = vrot.slane %v900, %v904
      %v923 = vunpack.c.l.b16 %v884
      %v924 = vunpack.c.l.b16 %v885
      %v925 = vunpack.c.l.b16 %v886
      %v926 = vunpack.c.l.b16 %v887
      %v927 = vunpack.c.l.b16 %v888
      %v928 = vunpack.c.l.b16 %v889
      %v929 = vunpack.c.l.b16 %v890
      %v930 = vunpack.c.l.b16 %v891
      %v931 = vunpack.c.l.b16 %v892
      %v932 = vunpack.c.l.b16 %v893
      %v933 = vunpack.c.l.b16 %v894
      %v934 = vunpack.c.l.b16 %v895
      %v935 = vunpack.c.l.b16 %v896
      %v936 = vunpack.c.l.b16 %v897
      %v937 = vunpack.c.l.b16 %v898
      %v938 = vunpack.c.l.b16 %v899
      %v939 = vpack.c.b16 %v924, %v923
      %v940 = vpack.c.b16 %v926, %v925
      %v941 = vpack.c.b16 %v928, %v927
      %v942 = vpack.c.b16 %v930, %v929
      %v943 = vpack.c.b16 %v932, %v931
      %v944 = vpack.c.b16 %v934, %v933
      %v945 = vpack.c.b16 %v936, %v935
      %v946 = vpack.c.b16 %v938, %v937
      %955 = vmatprep.subr.bf16.mxu0 0
      %956 = vmatpush1.bf16.msra.mxu0 %v946
      %957 = vmatprep.subr.bf16.mxu0 0
      %958 = vmatpush1.bf16.msra.mxu0 %v945
      %959 = vmatprep.subr.bf16.mxu0 0
      %960 = vmatpush1.bf16.msra.mxu0 %v944
      %961 = vmatprep.subr.bf16.mxu0 0
      %962 = vmatpush1.bf16.msra.mxu0 %v943
      %963 = vmatprep.subr.bf16.mxu0 0
      %964 = vmatpush1.bf16.msra.mxu0 %v942
      %965 = vmatprep.subr.bf16.mxu0 0
      %966 = vmatpush1.bf16.msra.mxu0 %v941
      %967 = vmatprep.subr.bf16.mxu0 0
      %968 = vmatpush1.bf16.msra.mxu0 %v940
      %969 = vmatprep.subr.bf16.mxu0 0
      %970 = vmatpush1.bf16.msra.mxu0 %v939
      %971 = vmatprep.subr.bf16.mxu0 0
      %972 = vmatpush2.bf16.msra.mxu0 0
      %973 = vmatprep.subr.bf16.mxu0 0
      %974 = vmatpush2.bf16.msra.mxu0 0
      %975 = vmatprep.subr.bf16.mxu0 0
      %976 = vmatpush2.bf16.msra.mxu0 0
      %977 = vmatprep.subr.bf16.mxu0 0
      %978 = vmatpush2.bf16.msra.mxu0 0
      %979 = vmatprep.subr.bf16.mxu0 0
      %980 = vmatpush2.bf16.msra.mxu0 0
      %981 = vmatprep.subr.bf16.mxu0 0
      %982 = vmatpush2.bf16.msra.mxu0 0
      %983 = vmatprep.subr.bf16.mxu0 0
      %984 = vmatpush2.bf16.msra.mxu0 0
      %985 = vmatprep.subr.bf16.mxu0 0
      %986 = vmatpush2.bf16.msra.mxu0 0
      %987 = vmatprep.mubr.bf16.mxu0 0
      %988 = vmatmul.mubr.bf16.gmra.mxu0 %v868
      %v989 = vpop.f32.mrf.mxu0
      %v990 = vadd.f32 %v905, %v989
      %v991 = vpop.f32.mrf.mxu0
      %v992 = vpop.f32.mrf.mxu0
      %v993 = vadd.f32 %v905, %v992
      %v994 = vpop.f32.mrf.mxu0
      %995 = vmatprep.mubr.bf16.mxu0 0
      %996 = vmatmul.mubr.bf16.gmra.mxu0 %v869
      %v997 = vpop.f32.mrf.mxu0
      %v998 = vadd.f32 %v905, %v997
      %v999 = vpop.f32.mrf.mxu0
      %v1000 = vpop.f32.mrf.mxu0
      %v1001 = vadd.f32 %v905, %v1000
      %v1002 = vpop.f32.mrf.mxu0
      %1003 = vmatprep.mubr.bf16.mxu0 0
      %1004 = vmatmul.mubr.bf16.gmra.mxu0 %v870
      %v1005 = vpop.f32.mrf.mxu0
      %v1006 = vadd.f32 %v905, %v1005
      %v1007 = vpop.f32.mrf.mxu0
      %v1008 = vpop.f32.mrf.mxu0
      %v1009 = vadd.f32 %v905, %v1008
      %v1010 = vpop.f32.mrf.mxu0
      %1011 = vmatprep.mubr.bf16.mxu0 0
      %1012 = vmatmul.mubr.bf16.gmra.mxu0 %v871
      %v1013 = vpop.f32.mrf.mxu0
      %v1014 = vadd.f32 %v905, %v1013
      %v1015 = vpop.f32.mrf.mxu0
      %v1016 = vpop.f32.mrf.mxu0
      %v1017 = vadd.f32 %v905, %v1016
      %v1018 = vpop.f32.mrf.mxu0
      %1019 = vmatprep.mubr.bf16.mxu0 0
      %1020 = vmatmul.mubr.bf16.gmra.mxu0 %v872
      %v1021 = vpop.f32.mrf.mxu0
      %v1022 = vadd.f32 %v905, %v1021
      %v1023 = vpop.f32.mrf.mxu0
      %v1024 = vpop.f32.mrf.mxu0
      %v1025 = vadd.f32 %v905, %v1024
      %v1026 = vpop.f32.mrf.mxu0
      %1027 = vmatprep.mubr.bf16.mxu0 0
      %1028 = vmatmul.mubr.bf16.gmra.mxu0 %v873
      %v1029 = vpop.f32.mrf.mxu0
      %v1030 = vadd.f32 %v905, %v1029
      %v1031 = vpop.f32.mrf.mxu0
      %v1032 = vpop.f32.mrf.mxu0
      %v1033 = vadd.f32 %v905, %v1032
      %v1034 = vpop.f32.mrf.mxu0
      %1035 = vmatprep.mubr.bf16.mxu0 0
      %1036 = vmatmul.mubr.bf16.gmra.mxu0 %v874
      %v1037 = vpop.f32.mrf.mxu0
      %v1038 = vadd.f32 %v905, %v1037
      %v1039 = vpop.f32.mrf.mxu0
      %v1040 = vpop.f32.mrf.mxu0
      %v1041 = vadd.f32 %v905, %v1040
      %v1042 = vpop.f32.mrf.mxu0
      %1043 = vmatprep.mubr.bf16.mxu0 0
      %1044 = vmatmul.mubr.bf16.gmra.mxu0 %v875
      %v1045 = vpop.f32.mrf.mxu0
      %v1046 = vadd.f32 %v905, %v1045
      %v1047 = vpop.f32.mrf.mxu0
      %v1048 = vpop.f32.mrf.mxu0
      %v1049 = vadd.f32 %v905, %v1048
      %v1050 = vpop.f32.mrf.mxu0
      %1051 = vmatprep.mubr.bf16.mxu0 0
      %1052 = vmatmul.mubr.bf16.gmra.mxu0 %v876
      %v1053 = vpop.f32.mrf.mxu0
      %v1054 = vadd.f32 %v905, %v1053
      %v1055 = vpop.f32.mrf.mxu0
      %v1056 = vpop.f32.mrf.mxu0
      %v1057 = vadd.f32 %v905, %v1056
      %v1058 = vpop.f32.mrf.mxu0
      %1059 = vmatprep.mubr.bf16.mxu0 0
      %1060 = vmatmul.mubr.bf16.gmra.mxu0 %v877
      %v1061 = vpop.f32.mrf.mxu0
      %v1062 = vadd.f32 %v905, %v1061
      %v1063 = vpop.f32.mrf.mxu0
      %v1064 = vpop.f32.mrf.mxu0
      %v1065 = vadd.f32 %v905, %v1064
      %v1066 = vpop.f32.mrf.mxu0
      %1067 = vmatprep.mubr.bf16.mxu0 0
      %1068 = vmatmul.mubr.bf16.gmra.mxu0 %v878
      %v1069 = vpop.f32.mrf.mxu0
      %v1070 = vadd.f32 %v905, %v1069
      %v1071 = vpop.f32.mrf.mxu0
      %v1072 = vpop.f32.mrf.mxu0
      %v1073 = vadd.f32 %v905, %v1072
      %v1074 = vpop.f32.mrf.mxu0
      %1075 = vmatprep.mubr.bf16.mxu0 0
      %1076 = vmatmul.mubr.bf16.gmra.mxu0 %v879
      %v1077 = vpop.f32.mrf.mxu0
      %v1078 = vadd.f32 %v905, %v1077
      %v1079 = vpop.f32.mrf.mxu0
      %v1080 = vpop.f32.mrf.mxu0
      %v1081 = vadd.f32 %v905, %v1080
      %v1082 = vpop.f32.mrf.mxu0
      %1083 = vmatprep.mubr.bf16.mxu0 0
      %1084 = vmatmul.mubr.bf16.gmra.mxu0 %v880
      %v1085 = vpop.f32.mrf.mxu0
      %v1086 = vadd.f32 %v905, %v1085
      %v1087 = vpop.f32.mrf.mxu0
      %v1088 = vpop.f32.mrf.mxu0
      %v1089 = vadd.f32 %v905, %v1088
      %v1090 = vpop.f32.mrf.mxu0
      %1091 = vmatprep.mubr.bf16.mxu0 0
      %1092 = vmatmul.mubr.bf16.gmra.mxu0 %v881
      %v1093 = vpop.f32.mrf.mxu0
      %v1094 = vadd.f32 %v905, %v1093
      %v1095 = vpop.f32.mrf.mxu0
      %v1096 = vpop.f32.mrf.mxu0
      %v1097 = vadd.f32 %v905, %v1096
      %v1098 = vpop.f32.mrf.mxu0
      %1099 = vmatprep.mubr.bf16.mxu0 0
      %1100 = vmatmul.mubr.bf16.gmra.mxu0 %v882
      %v1101 = vpop.f32.mrf.mxu0
      %v1102 = vadd.f32 %v905, %v1101
      %v1103 = vpop.f32.mrf.mxu0
      %v1104 = vpop.f32.mrf.mxu0
      %v1105 = vadd.f32 %v905, %v1104
      %v1106 = vpop.f32.mrf.mxu0
      %1107 = vmatprep.mubr.bf16.mxu0 0
      %1108 = vmatmul.mubr.bf16.gmra.mxu0 %v883
      %v1109 = vpop.f32.mrf.mxu0
      %v1110 = vadd.f32 %v905, %v1109
      %v1111 = vpop.f32.mrf.mxu0
      %v1112 = vpop.f32.mrf.mxu0
      %v1113 = vadd.f32 %v905, %v1112
      %v1114 = vpop.f32.mrf.mxu0
      %1115 = vdwg.mxu0
      %vm1116 = vcmask 64512
      %v1117 = vsel %vm1116, %v990, -inf
      %1118 = vmax.xlane.f32.xlu0 %v1117
      %v1119 = vpop.xlane.xlu0 %1118
      %v1120 = vsel %vm1116, %v993, -inf
      %1121 = vmax.xlane.f32.xlu0 %v1120
      %v1122 = vpop.xlane.xlu0 %1121
      %v1123 = vsel %vm1116, %v998, -inf
      %1124 = vmax.xlane.f32.xlu0 %v1123
      %v1125 = vpop.xlane.xlu0 %1124
      %v1126 = vsel %vm1116, %v1001, -inf
      %1127 = vmax.xlane.f32.xlu0 %v1126
      %v1128 = vpop.xlane.xlu0 %1127
      %v1129 = vsel %vm1116, %v1006, -inf
      %1130 = vmax.xlane.f32.xlu0 %v1129
      %v1131 = vpop.xlane.xlu0 %1130
      %v1132 = vsel %vm1116, %v1009, -inf
      %1133 = vmax.xlane.f32.xlu0 %v1132
      %v1134 = vpop.xlane.xlu0 %1133
      %v1135 = vsel %vm1116, %v1014, -inf
      %1136 = vmax.xlane.f32.xlu0 %v1135
      %v1137 = vpop.xlane.xlu0 %1136
      %v1138 = vsel %vm1116, %v1017, -inf
      %1139 = vmax.xlane.f32.xlu0 %v1138
      %v1140 = vpop.xlane.xlu0 %1139
      %v1141 = vsel %vm1116, %v1022, -inf
      %1142 = vmax.xlane.f32.xlu0 %v1141
      %v1143 = vpop.xlane.xlu0 %1142
      %v1144 = vsel %vm1116, %v1025, -inf
      %1145 = vmax.xlane.f32.xlu0 %v1144
      %v1146 = vpop.xlane.xlu0 %1145
      %v1147 = vsel %vm1116, %v1030, -inf
      %1148 = vmax.xlane.f32.xlu0 %v1147
      %v1149 = vpop.xlane.xlu0 %1148
      %v1150 = vsel %vm1116, %v1033, -inf
      %1151 = vmax.xlane.f32.xlu0 %v1150
      %v1152 = vpop.xlane.xlu0 %1151
      %v1153 = vsel %vm1116, %v1038, -inf
      %1154 = vmax.xlane.f32.xlu0 %v1153
      %v1155 = vpop.xlane.xlu0 %1154
      %v1156 = vsel %vm1116, %v1041, -inf
      %1157 = vmax.xlane.f32.xlu0 %v1156
      %v1158 = vpop.xlane.xlu0 %1157
      %v1159 = vsel %vm1116, %v1046, -inf
      %1160 = vmax.xlane.f32.xlu0 %v1159
      %v1161 = vpop.xlane.xlu0 %1160
      %v1162 = vsel %vm1116, %v1049, -inf
      %1163 = vmax.xlane.f32.xlu0 %v1162
      %v1164 = vpop.xlane.xlu0 %1163
      %v1165 = vsel %vm1116, %v1054, -inf
      %1166 = vmax.xlane.f32.xlu0 %v1165
      %v1167 = vpop.xlane.xlu0 %1166
      %v1168 = vsel %vm1116, %v1057, -inf
      %1169 = vmax.xlane.f32.xlu0 %v1168
      %v1170 = vpop.xlane.xlu0 %1169
      %v1171 = vsel %vm1116, %v1062, -inf
      %1172 = vmax.xlane.f32.xlu0 %v1171
      %v1173 = vpop.xlane.xlu0 %1172
      %v1174 = vsel %vm1116, %v1065, -inf
      %1175 = vmax.xlane.f32.xlu0 %v1174
      %v1176 = vpop.xlane.xlu0 %1175
      %v1177 = vsel %vm1116, %v1070, -inf
      %1178 = vmax.xlane.f32.xlu0 %v1177
      %v1179 = vpop.xlane.xlu0 %1178
      %v1180 = vsel %vm1116, %v1073, -inf
      %1181 = vmax.xlane.f32.xlu0 %v1180
      %v1182 = vpop.xlane.xlu0 %1181
      %v1183 = vsel %vm1116, %v1078, -inf
      %1184 = vmax.xlane.f32.xlu0 %v1183
      %v1185 = vpop.xlane.xlu0 %1184
      %v1186 = vsel %vm1116, %v1081, -inf
      %1187 = vmax.xlane.f32.xlu0 %v1186
      %v1188 = vpop.xlane.xlu0 %1187
      %v1189 = vsel %vm1116, %v1086, -inf
      %1190 = vmax.xlane.f32.xlu0 %v1189
      %v1191 = vpop.xlane.xlu0 %1190
      %v1192 = vsel %vm1116, %v1089, -inf
      %1193 = vmax.xlane.f32.xlu0 %v1192
      %v1194 = vpop.xlane.xlu0 %1193
      %v1195 = vsel %vm1116, %v1094, -inf
      %1196 = vmax.xlane.f32.xlu0 %v1195
      %v1197 = vpop.xlane.xlu0 %1196
      %v1198 = vsel %vm1116, %v1097, -inf
      %1199 = vmax.xlane.f32.xlu0 %v1198
      %v1200 = vpop.xlane.xlu0 %1199
      %v1201 = vsel %vm1116, %v1102, -inf
      %1202 = vmax.xlane.f32.xlu0 %v1201
      %v1203 = vpop.xlane.xlu0 %1202
      %v1204 = vsel %vm1116, %v1105, -inf
      %1205 = vmax.xlane.f32.xlu0 %v1204
      %v1206 = vpop.xlane.xlu0 %1205
      %v1207 = vsel %vm1116, %v1110, -inf
      %1208 = vmax.xlane.f32.xlu0 %v1207
      %v1209 = vpop.xlane.xlu0 %1208
      %v1210 = vsel %vm1116, %v1113, -inf
      %1211 = vmax.xlane.f32.xlu0 %v1210
      %v1212 = vpop.xlane.xlu0 %1211
      %v1213 = vsub.f32 %v990, %v1119
      %v1214 = vsub.f32 %v993, %v1122
      %v1215 = vsub.f32 %v998, %v1125
      %v1216 = vsub.f32 %v1001, %v1128
      %v1217 = vsub.f32 %v1006, %v1131
      %v1218 = vsub.f32 %v1009, %v1134
      %v1219 = vsub.f32 %v1014, %v1137
      %v1220 = vsub.f32 %v1017, %v1140
      %v1221 = vsub.f32 %v1022, %v1143
      %v1222 = vsub.f32 %v1025, %v1146
      %v1223 = vsub.f32 %v1030, %v1149
      %v1224 = vsub.f32 %v1033, %v1152
      %v1225 = vsub.f32 %v1038, %v1155
      %v1226 = vsub.f32 %v1041, %v1158
      %v1227 = vsub.f32 %v1046, %v1161
      %v1228 = vsub.f32 %v1049, %v1164
      %v1229 = vsub.f32 %v1054, %v1167
      %v1230 = vsub.f32 %v1057, %v1170
      %v1231 = vsub.f32 %v1062, %v1173
      %v1232 = vsub.f32 %v1065, %v1176
      %v1233 = vsub.f32 %v1070, %v1179
      %v1234 = vsub.f32 %v1073, %v1182
      %v1235 = vsub.f32 %v1078, %v1185
      %v1236 = vsub.f32 %v1081, %v1188
      %v1237 = vsub.f32 %v1086, %v1191
      %v1238 = vsub.f32 %v1089, %v1194
      %v1239 = vsub.f32 %v1094, %v1197
      %v1240 = vsub.f32 %v1097, %v1200
      %v1241 = vsub.f32 %v1102, %v1203
      %v1242 = vsub.f32 %v1105, %v1206
      %v1243 = vsub.f32 %v1110, %v1209
      %v1244 = vsub.f32 %v1113, %v1212
      %v1245 = vmul.f32 %v1213, 1.442695
      %v1246 = vpow.pop %v1245
      %v1247 = vmul.f32 %v1214, 1.442695
      %v1248 = vpow.pop %v1247
      %v1249 = vmul.f32 %v1215, 1.442695
      %v1250 = vpow.pop %v1249
      %v1251 = vmul.f32 %v1216, 1.442695
      %v1252 = vpow.pop %v1251
      %v1253 = vmul.f32 %v1217, 1.442695
      %v1254 = vpow.pop %v1253
      %v1255 = vmul.f32 %v1218, 1.442695
      %v1256 = vpow.pop %v1255
      %v1257 = vmul.f32 %v1219, 1.442695
      %v1258 = vpow.pop %v1257
      %v1259 = vmul.f32 %v1220, 1.442695
      %v1260 = vpow.pop %v1259
      %v1261 = vmul.f32 %v1221, 1.442695
      %v1262 = vpow.pop %v1261
      %v1263 = vmul.f32 %v1222, 1.442695
      %v1264 = vpow.pop %v1263
      %v1265 = vmul.f32 %v1223, 1.442695
      %v1266 = vpow.pop %v1265
      %v1267 = vmul.f32 %v1224, 1.442695
      %v1268 = vpow.pop %v1267
      %v1269 = vmul.f32 %v1225, 1.442695
      %v1270 = vpow.pop %v1269
      %v1271 = vmul.f32 %v1226, 1.442695
      %v1272 = vpow.pop %v1271
      %v1273 = vmul.f32 %v1227, 1.442695
      %v1274 = vpow.pop %v1273
      %v1275 = vmul.f32 %v1228, 1.442695
      %v1276 = vpow.pop %v1275
      %v1277 = vmul.f32 %v1229, 1.442695
      %v1278 = vpow.pop %v1277
      %v1279 = vmul.f32 %v1230, 1.442695
      %v1280 = vpow.pop %v1279
      %v1281 = vmul.f32 %v1231, 1.442695
      %v1282 = vpow.pop %v1281
      %v1283 = vmul.f32 %v1232, 1.442695
      %v1284 = vpow.pop %v1283
      %v1285 = vmul.f32 %v1233, 1.442695
      %v1286 = vpow.pop %v1285
      %v1287 = vmul.f32 %v1234, 1.442695
      %v1288 = vpow.pop %v1287
      %v1289 = vmul.f32 %v1235, 1.442695
      %v1290 = vpow.pop %v1289
      %v1291 = vmul.f32 %v1236, 1.442695
      %v1292 = vpow.pop %v1291
      %v1293 = vmul.f32 %v1237, 1.442695
      %v1294 = vpow.pop %v1293
      %v1295 = vmul.f32 %v1238, 1.442695
      %v1296 = vpow.pop %v1295
      %v1297 = vmul.f32 %v1239, 1.442695
      %v1298 = vpow.pop %v1297
      %v1299 = vmul.f32 %v1240, 1.442695
      %v1300 = vpow.pop %v1299
      %v1301 = vmul.f32 %v1241, 1.442695
      %v1302 = vpow.pop %v1301
      %v1303 = vmul.f32 %v1242, 1.442695
      %v1304 = vpow.pop %v1303
      %v1305 = vmul.f32 %v1243, 1.442695
      %v1306 = vpow.pop %v1305
      %v1307 = vmul.f32 %v1244, 1.442695
      %v1308 = vpow.pop %v1307
      %v1309 = vsel %vm1116, %v1246, 0.0
      %1310 = vadd.xlane.f32.xlu0 %v1309
      %v1311 = vpop.xlane.xlu0 %1310
      %v1312 = vsel %vm1116, %v1248, 0.0
      %1313 = vadd.xlane.f32.xlu0 %v1312
      %v1314 = vpop.xlane.xlu0 %1313
      %v1315 = vsel %vm1116, %v1250, 0.0
      %1316 = vadd.xlane.f32.xlu0 %v1315
      %v1317 = vpop.xlane.xlu0 %1316
      %v1318 = vsel %vm1116, %v1252, 0.0
      %1319 = vadd.xlane.f32.xlu0 %v1318
      %v1320 = vpop.xlane.xlu0 %1319
      %v1321 = vsel %vm1116, %v1254, 0.0
      %1322 = vadd.xlane.f32.xlu0 %v1321
      %v1323 = vpop.xlane.xlu0 %1322
      %v1324 = vsel %vm1116, %v1256, 0.0
      %1325 = vadd.xlane.f32.xlu0 %v1324
      %v1326 = vpop.xlane.xlu0 %1325
      %v1327 = vsel %vm1116, %v1258, 0.0
      %1328 = vadd.xlane.f32.xlu0 %v1327
      %v1329 = vpop.xlane.xlu0 %1328
      %v1330 = vsel %vm1116, %v1260, 0.0
      %1331 = vadd.xlane.f32.xlu0 %v1330
      %v1332 = vpop.xlane.xlu0 %1331
      %v1333 = vsel %vm1116, %v1262, 0.0
      %1334 = vadd.xlane.f32.xlu0 %v1333
      %v1335 = vpop.xlane.xlu0 %1334
      %v1336 = vsel %vm1116, %v1264, 0.0
      %1337 = vadd.xlane.f32.xlu0 %v1336
      %v1338 = vpop.xlane.xlu0 %1337
      %v1339 = vsel %vm1116, %v1266, 0.0
      %1340 = vadd.xlane.f32.xlu0 %v1339
      %v1341 = vpop.xlane.xlu0 %1340
      %v1342 = vsel %vm1116, %v1268, 0.0
      %1343 = vadd.xlane.f32.xlu0 %v1342
      %v1344 = vpop.xlane.xlu0 %1343
      %v1345 = vsel %vm1116, %v1270, 0.0
      %1346 = vadd.xlane.f32.xlu0 %v1345
      %v1347 = vpop.xlane.xlu0 %1346
      %v1348 = vsel %vm1116, %v1272, 0.0
      %1349 = vadd.xlane.f32.xlu0 %v1348
      %v1350 = vpop.xlane.xlu0 %1349
      %v1351 = vsel %vm1116, %v1274, 0.0
      %1352 = vadd.xlane.f32.xlu0 %v1351
      %v1353 = vpop.xlane.xlu0 %1352
      %v1354 = vsel %vm1116, %v1276, 0.0
      %1355 = vadd.xlane.f32.xlu0 %v1354
      %v1356 = vpop.xlane.xlu0 %1355
      %v1357 = vsel %vm1116, %v1278, 0.0
      %1358 = vadd.xlane.f32.xlu0 %v1357
      %v1359 = vpop.xlane.xlu0 %1358
      %v1360 = vsel %vm1116, %v1280, 0.0
      %1361 = vadd.xlane.f32.xlu0 %v1360
      %v1362 = vpop.xlane.xlu0 %1361
      %v1363 = vsel %vm1116, %v1282, 0.0
      %1364 = vadd.xlane.f32.xlu0 %v1363
      %v1365 = vpop.xlane.xlu0 %1364
      %v1366 = vsel %vm1116, %v1284, 0.0
      %1367 = vadd.xlane.f32.xlu0 %v1366
      %v1368 = vpop.xlane.xlu0 %1367
      %v1369 = vsel %vm1116, %v1286, 0.0
      %1370 = vadd.xlane.f32.xlu0 %v1369
      %v1371 = vpop.xlane.xlu0 %1370
      %v1372 = vsel %vm1116, %v1288, 0.0
      %1373 = vadd.xlane.f32.xlu0 %v1372
      %v1374 = vpop.xlane.xlu0 %1373
      %v1375 = vsel %vm1116, %v1290, 0.0
      %1376 = vadd.xlane.f32.xlu0 %v1375
      %v1377 = vpop.xlane.xlu0 %1376
      %v1378 = vsel %vm1116, %v1292, 0.0
      %1379 = vadd.xlane.f32.xlu0 %v1378
      %v1380 = vpop.xlane.xlu0 %1379
      %v1381 = vsel %vm1116, %v1294, 0.0
      %1382 = vadd.xlane.f32.xlu0 %v1381
      %v1383 = vpop.xlane.xlu0 %1382
      %v1384 = vsel %vm1116, %v1296, 0.0
      %1385 = vadd.xlane.f32.xlu0 %v1384
      %v1386 = vpop.xlane.xlu0 %1385
      %v1387 = vsel %vm1116, %v1298, 0.0
      %1388 = vadd.xlane.f32.xlu0 %v1387
      %v1389 = vpop.xlane.xlu0 %1388
      %v1390 = vsel %vm1116, %v1300, 0.0
      %1391 = vadd.xlane.f32.xlu0 %v1390
      %v1392 = vpop.xlane.xlu0 %1391
      %v1393 = vsel %vm1116, %v1302, 0.0
      %1394 = vadd.xlane.f32.xlu0 %v1393
      %v1395 = vpop.xlane.xlu0 %1394
      %v1396 = vsel %vm1116, %v1304, 0.0
      %1397 = vadd.xlane.f32.xlu0 %v1396
      %v1398 = vpop.xlane.xlu0 %1397
      %v1399 = vsel %vm1116, %v1306, 0.0
      %1400 = vadd.xlane.f32.xlu0 %v1399
      %v1401 = vpop.xlane.xlu0 %1400
      %v1402 = vsel %vm1116, %v1308, 0.0
      %1403 = vadd.xlane.f32.xlu0 %v1402
      %v1404 = vpop.xlane.xlu0 %1403
      %v1405 = vrcp.pop %v1311
      %v1406 = vmul.f32 %v1246, %v1405
      %v1407 = vrcp.pop %v1314
      %v1408 = vmul.f32 %v1248, %v1407
      %v1409 = vrcp.pop %v1317
      %v1410 = vmul.f32 %v1250, %v1409
      %v1411 = vrcp.pop %v1320
      %v1412 = vmul.f32 %v1252, %v1411
      %v1413 = vrcp.pop %v1323
      %v1414 = vmul.f32 %v1254, %v1413
      %v1415 = vrcp.pop %v1326
      %v1416 = vmul.f32 %v1256, %v1415
      %v1417 = vrcp.pop %v1329
      %v1418 = vmul.f32 %v1258, %v1417
      %v1419 = vrcp.pop %v1332
      %v1420 = vmul.f32 %v1260, %v1419
      %v1421 = vrcp.pop %v1335
      %v1422 = vmul.f32 %v1262, %v1421
      %v1423 = vrcp.pop %v1338
      %v1424 = vmul.f32 %v1264, %v1423
      %v1425 = vrcp.pop %v1341
      %v1426 = vmul.f32 %v1266, %v1425
      %v1427 = vrcp.pop %v1344
      %v1428 = vmul.f32 %v1268, %v1427
      %v1429 = vrcp.pop %v1347
      %v1430 = vmul.f32 %v1270, %v1429
      %v1431 = vrcp.pop %v1350
      %v1432 = vmul.f32 %v1272, %v1431
      %v1433 = vrcp.pop %v1353
      %v1434 = vmul.f32 %v1274, %v1433
      %v1435 = vrcp.pop %v1356
      %v1436 = vmul.f32 %v1276, %v1435
      %v1437 = vrcp.pop %v1359
      %v1438 = vmul.f32 %v1278, %v1437
      %v1439 = vrcp.pop %v1362
      %v1440 = vmul.f32 %v1280, %v1439
      %v1441 = vrcp.pop %v1365
      %v1442 = vmul.f32 %v1282, %v1441
      %v1443 = vrcp.pop %v1368
      %v1444 = vmul.f32 %v1284, %v1443
      %v1445 = vrcp.pop %v1371
      %v1446 = vmul.f32 %v1286, %v1445
      %v1447 = vrcp.pop %v1374
      %v1448 = vmul.f32 %v1288, %v1447
      %v1449 = vrcp.pop %v1377
      %v1450 = vmul.f32 %v1290, %v1449
      %v1451 = vrcp.pop %v1380
      %v1452 = vmul.f32 %v1292, %v1451
      %v1453 = vrcp.pop %v1383
      %v1454 = vmul.f32 %v1294, %v1453
      %v1455 = vrcp.pop %v1386
      %v1456 = vmul.f32 %v1296, %v1455
      %v1457 = vrcp.pop %v1389
      %v1458 = vmul.f32 %v1298, %v1457
      %v1459 = vrcp.pop %v1392
      %v1460 = vmul.f32 %v1300, %v1459
      %v1461 = vrcp.pop %v1395
      %v1462 = vmul.f32 %v1302, %v1461
      %v1463 = vrcp.pop %v1398
      %v1464 = vmul.f32 %v1304, %v1463
      %v1465 = vrcp.pop %v1401
      %v1466 = vmul.f32 %v1306, %v1465
      %v1467 = vrcp.pop %v1404
      %v1468 = vmul.f32 %v1308, %v1467
      %1469 = vst.msk [vmem:[%s280] sm:$0xff] %vm1116, %v1406
      %1470 = vst.msk [vmem:[%s280 + $0x8] sm:$0xff] %vm1116, %v1408
      %1471 = vst.msk [vmem:[%s280 + $0x10] sm:$0xff] %vm1116, %v1410
      %1472 = vst.msk [vmem:[%s280 + $0x18] sm:$0xff] %vm1116, %v1412
      %1473 = vst.msk [vmem:[%s280 + $0x20] sm:$0xff] %vm1116, %v1414
      %1474 = vst.msk [vmem:[%s280 + $0x28] sm:$0xff] %vm1116, %v1416
      %1475 = vst.msk [vmem:[%s280 + $0x30] sm:$0xff] %vm1116, %v1418
      %1476 = vst.msk [vmem:[%s280 + $0x38] sm:$0xff] %vm1116, %v1420
      %1477 = vst.msk [vmem:[%s280 + $0x40] sm:$0xff] %vm1116, %v1422
      %1478 = vst.msk [vmem:[%s280 + $0x48] sm:$0xff] %vm1116, %v1424
      %1479 = vst.msk [vmem:[%s280 + $0x50] sm:$0xff] %vm1116, %v1426
      %1480 = vst.msk [vmem:[%s280 + $0x58] sm:$0xff] %vm1116, %v1428
      %1481 = vst.msk [vmem:[%s280 + $0x60] sm:$0xff] %vm1116, %v1430
      %1482 = vst.msk [vmem:[%s280 + $0x68] sm:$0xff] %vm1116, %v1432
      %1483 = vst.msk [vmem:[%s280 + $0x70] sm:$0xff] %vm1116, %v1434
      %1484 = vst.msk [vmem:[%s280 + $0x78] sm:$0xff] %vm1116, %v1436
      %1485 = vst.msk [vmem:[%s280 + $0x80] sm:$0xff] %vm1116, %v1438
      %1486 = vst.msk [vmem:[%s280 + $0x88] sm:$0xff] %vm1116, %v1440
      %1487 = vst.msk [vmem:[%s280 + $0x90] sm:$0xff] %vm1116, %v1442
      %1488 = vst.msk [vmem:[%s280 + $0x98] sm:$0xff] %vm1116, %v1444
      %1489 = vst.msk [vmem:[%s280 + $0xa0] sm:$0xff] %vm1116, %v1446
      %1490 = vst.msk [vmem:[%s280 + $0xa8] sm:$0xff] %vm1116, %v1448
      %1491 = vst.msk [vmem:[%s280 + $0xb0] sm:$0xff] %vm1116, %v1450
      %1492 = vst.msk [vmem:[%s280 + $0xb8] sm:$0xff] %vm1116, %v1452
      %1493 = vst.msk [vmem:[%s280 + $0xc0] sm:$0xff] %vm1116, %v1454
      %1494 = vst.msk [vmem:[%s280 + $0xc8] sm:$0xff] %vm1116, %v1456
      %1495 = vst.msk [vmem:[%s280 + $0xd0] sm:$0xff] %vm1116, %v1458
      %1496 = vst.msk [vmem:[%s280 + $0xd8] sm:$0xff] %vm1116, %v1460
      %1497 = vst.msk [vmem:[%s280 + $0xe0] sm:$0xff] %vm1116, %v1462
      %1498 = vst.msk [vmem:[%s280 + $0xe8] sm:$0xff] %vm1116, %v1464
      %1499 = vst.msk [vmem:[%s280 + $0xf0] sm:$0xff] %vm1116, %v1466
      %1500 = vst.msk [vmem:[%s280 + $0xf8] sm:$0xff] %vm1116, %v1468
      %s1501 = smul.u32 32, %s18
      %p1502 = scmp.lt.s32.totalorder %s1501, 63
      %s1503 = scalar_select %p1502, %s1501, 63
      %s1504 = smul.addr %s1503, 8
      %s1505 = scalar_lea.vmem %s7, %s1504
      // Predicated region
      $region49: #{tpu_custom_call.1} parent=47 // pred_check
        %p1506 = pneg %p188
      $region50: #{tpu_custom_call.1} parent=47 // pred_check_branch
        %1508 = sbr.rel (%p1506) target = $region52
      $region51: #{tpu_custom_call.1} parent=47 // pred_region
        %s1509 = smul.u32 32, %s18
      $region52: #{tpu_custom_call.1} parent=47 // pred_fallthru
        _
    $region48: #{tpu_custom_call.1} parent=5 // pred_fallthru
      _
    %p1510 = scmp.le.s32.totalorder 2, %s13
    // Predicated region
    $region53: #{tpu_custom_call.1} parent=5 // pred_check
      %p1511 = pneg %p1510
    $region54: #{tpu_custom_call.1} parent=5 // pred_check_branch
      %1513 = sbr.rel (%p1511) target = $region56
    $region55: #{tpu_custom_call.1} parent=5 // pred_region
      %s1514 = ssub.s32 %s13, 2
      // Predicated region
      $region57: #{tpu_custom_call.1} parent=55 // pred_check
        %p1515 = pneg %p194
      $region58: #{tpu_custom_call.1} parent=55 // pred_check_branch
        %1517 = sbr.rel (%p1515) target = $region60
      $region59: #{tpu_custom_call.1} parent=55 // pred_region
        %s1518 = smul.u32 32, %s19
        %p1519 = scmp.lt.s32.totalorder %s1518, 63
        %s1520 = scalar_select %p1519, %s1518, 63
        %s1521 = smul.addr %s1520, 8
        %s1522 = scalar_lea.vmem %s7, %s1521
      $region60: #{tpu_custom_call.1} parent=55 // pred_fallthru
        _
    $region56: #{tpu_custom_call.1} parent=5 // pred_fallthru
      _
  $region6: #{tpu_custom_call.1} parent=0 // loop_footer
    %s17 = sadd.s32 1, %s13
  $region7: #{tpu_custom_call.1} parent=0 // loop_footer_branch
    %12 = sbr.rel target = $region3
  $region8: #{tpu_custom_call.1} parent=0 // loop_exit
    _

</llo_original>
